<compile_context>
chip_gen: v6e
topology: v6e:2x2x1
jax: 0.10.0
libtpu: 0.0.40
codegen_flags: <defaults>
</compile_context>

<pallas_src>
import functools

import numpy as np
import jax
import jax.numpy as jnp
from jax import lax
from jax.experimental import pallas as pl
from jax.experimental.pallas import tpu as pltpu


LANE = 128            # pad latent / hidden dims to full 128-lane width
MAX_ROW_BLOCK = 256   # cap on the batched-row tile (MXU rows on v6e/v7x)


# ----------------------------- fused Pallas kernel -----------------------------

def _fused_kernel(denoise_steps, guidance, unroll,
                  x_ref, yc_ref,
                  we_ref, be_ref, w1_ref, b1_ref, w2s_ref, b2s_ref,
                  wd_ref, bd_ref,
                  z0_ref, zf_ref, dec_ref):
    """encode once -> U x (CFG denoise loop + decode), all resident in VMEM.

    x_ref  : (RB, N*N)        flattened edge rows (tril gather folded into we)
    yc_ref : (U, RB, Hp)      conditional label embedding per combo/row
    we/be  : encoder weight/bias (gather-folded, lane-padded)
    w1/b1  : denoiser layer 1
    w2s/b2s: denoiser layer 2 with the -0.1 step size folded in
    wd/bd  : decoder weight/bias (symmetric scatter folded)
    z0_ref : (RB, Lp)         initial latent (encode_feat output)
    zf_ref : (U, RB, Lp)      denoised latent per combo
    dec_ref: (U, RB, N*N)     decoded symmetric zero-diagonal sample rows
    """
    # --- encode: h = vae_encoder.encode_feat(edge_mtx), label/guidance independent ---
    x = x_ref[...]
    z0 = jnp.dot(x, we_ref[...], preferred_element_type=jnp.float32) + be_ref[...]
    z0_ref[...] = z0

    w1 = w1_ref[...]; b1 = b1_ref[...]
    w2s = w2s_ref[...]; b2s = b2s_ref[...]
    wd = wd_ref[...]; bd = bd_ref[...]

    # --- classifier-free-guided denoise per (label, guidance) combo ---
    for u, g in enumerate(guidance):          # static Python loop; g is a static float
        yc = yc_ref[u]                        # (RB, Hp) conditional embedding

        def step(_, z, yc=yc, g=g):
            zw1 = jnp.dot(z, w1, preferred_element_type=jnp.float32) + b1
            h_u = jnp.maximum(zw1, 0.0)       # unconditional branch (y_u = 0)
            h_c = jnp.maximum(zw1 + yc, 0.0)  # conditional branch
            # second layer is linear => blend pre-matmul; step size folded into w2s/b2s
            h_blend = h_u + g * (h_c - h_u)
            return z + jnp.dot(h_blend, w2s, preferred_element_type=jnp.float32) + b2s

        z = lax.fori_loop(0, denoise_steps, step, z0, unroll=unroll)
        zf_ref[u] = z
        # decode straight to a symmetric, zero-diagonal (N*N)-wide row
        dec_ref[u] = jnp.dot(z, wd, preferred_element_type=jnp.float32) + bd


def _fused_sample_call(x, yc, prep, denoise_steps, guidance, row_block):
    Bp, NN = x.shape
    U = yc.shape[0]
    Lp = prep["we"].shape[1]
    Hp = prep["w1"].shape[1]
    nblk = Bp // row_block
    # bounded unroll for long diffusion schedules (keeps vreg pressure sane)
    unroll = True if denoise_steps <= 8 else 4

    kernel = functools.partial(_fused_kernel, denoise_steps, guidance, unroll)
    row2 = lambda i: (i, 0)      # per-row-block 2-D inputs/outputs
    row3 = lambda i: (0, i, 0)   # per-row-block 3-D (combo-major) outputs
    full = lambda i: (0, 0)      # weights: whole array, VMEM resident every block
    # TODO(synk): when weights grow to checkpoint size, single-buffer the constant
    # weight specs (pipeline_mode=pl.Buffered(1)) to halve their VMEM footprint.

    return pl.pallas_call(
        kernel,
        out_shape=(jax.ShapeDtypeStruct((Bp, Lp), jnp.float32),      # z0
                   jax.ShapeDtypeStruct((U, Bp, Lp), jnp.float32),   # zf per combo
                   jax.ShapeDtypeStruct((U, Bp, NN), jnp.float32)),  # decoded rows
        grid=(nblk,),
        in_specs=[
            pl.BlockSpec((row_block, NN), row2),      # x
            pl.BlockSpec((U, row_block, Hp), row3),   # yc
            pl.BlockSpec((NN, Lp), full),             # w_enc (folded, padded)
            pl.BlockSpec((1, Lp), full),              # b_enc
            pl.BlockSpec((Lp, Hp), full),             # w1
            pl.BlockSpec((1, Hp), full),              # b1
            pl.BlockSpec((Hp, Lp), full),             # w2 * (-0.1)
            pl.BlockSpec((1, Lp), full),              # b2 * (-0.1)
            pl.BlockSpec((Lp, NN), full),             # w_dec (folded)
            pl.BlockSpec((1, NN), full),              # b_dec (folded)
        ],
        out_specs=(pl.BlockSpec((row_block, Lp), row2),
                   pl.BlockSpec((U, row_block, Lp), row3),
                   pl.BlockSpec((U, row_block, NN), row3)),
        compiler_params=pltpu.CompilerParams(
            dimension_semantics=("parallel",)),
    )(x, yc, prep["we"], prep["be"], prep["w1"], prep["b1"],
      prep["w2s"], prep["b2s"], prep["wd"], prep["bd"])


# ----------------------------- params / weight prep -----------------------------

def make_params(key, edge_dim, latent_dim, hidden_dim):
    ks = jax.random.split(key, 5)
    s = 0.05
    return dict(
        w_enc=jax.random.normal(ks[0], (edge_dim, latent_dim), jnp.float32) * s,
        b_enc=jnp.zeros((1, latent_dim), jnp.float32),
        w1=jax.random.normal(ks[1], (latent_dim, hidden_dim), jnp.float32) * s,
        b1=jnp.zeros((1, hidden_dim), jnp.float32),
        w2=jax.random.normal(ks[2], (hidden_dim, latent_dim), jnp.float32) * s,
        b2=jnp.zeros((1, latent_dim), jnp.float32),
        w_dec=jax.random.normal(ks[3], (latent_dim, edge_dim), jnp.float32) * s,
        b_dec=jnp.zeros((1, edge_dim), jnp.float32),
        label_emb=jax.random.normal(ks[4], (2, hidden_dim), jnp.float32) * s,
    )


def prepare_weights(params, n):
    """Once-per-checkpoint prep (NOT inside the jitted forward):
    tril-gather / symmetric-scatter folds, lane padding to 128, step-size fold."""
    L = params["w_enc"].shape[1]
    H = params["w1"].shape[1]
    NN = n * n
    Lp = ((L + LANE - 1) // LANE) * LANE
    Hp = ((H + LANE - 1) // LANE) * LANE

    tr, tc = np.tril_indices(n, k=-1)   # static numpy indices
    lo = tr * n + tc
    hi = tc * n + tr

    we = jnp.zeros((NN, Lp), jnp.float32).at[lo, :L].set(params["w_enc"])
    be = jnp.zeros((1, Lp), jnp.float32).at[:, :L].set(params["b_enc"])
    w1 = jnp.zeros((Lp, Hp), jnp.float32).at[:L, :H].set(params["w1"])
    b1 = jnp.zeros((1, Hp), jnp.float32).at[:, :H].set(params["b1"])
    w2s = jnp.zeros((Hp, Lp), jnp.float32).at[:H, :L].set(-0.1 * params["w2"])
    b2s = jnp.zeros((1, Lp), jnp.float32).at[:, :L].set(-0.1 * params["b2"])
    wd = (jnp.zeros((Lp, NN), jnp.float32)
          .at[:L, lo].set(params["w_dec"])
          .at[:L, hi].set(params["w_dec"]))
    bd = (jnp.zeros((1, NN), jnp.float32)
          .at[:, lo].set(params["b_dec"])
          .at[:, hi].set(params["b_dec"]))
    yemb = jnp.zeros((2, Hp), jnp.float32).at[:, :H].set(params["label_emb"])
    return dict(we=we, be=be, w1=w1, b1=b1, w2s=w2s, b2s=b2s, wd=wd, bd=bd,
                label_emb=yemb)


# ----------------------------------- forward -----------------------------------

@functools.partial(jax.jit, static_argnames=(
    "condition_mode", "sample_num", "guidance_level", "denoise_steps", "latent_dim"))
def inference_predictor_forward(prep, edge_mtx, condition, label,
                                condition_mode="union", sample_num=3,
                                guidance_level=(0.5,), denoise_steps=4,
                                latent_dim=32):
    """Mirrors InferencePredictor.forward.

    Returns (label,
             samples stacked on dim=1 -> (B, K, N, N),
             labels  stacked on dim=1 -> (B, K),
             latents stacked on dim=1 -> (B, K, latent_dim)).
    `condition` / condition_key are unused, as in the reference forward.
    """
    del condition
    assert condition_mode in ("identical", "opposite", "union")
    B, N, _ = edge_mtx.shape
    NN = N * N
    L = latent_dim

    # ---- unique (label, guidance) combinations, in the original branch order ----
    combo_labels, combo_g = [], []
    for gd in guidance_level:
        if condition_mode in ("identical", "union"):
            combo_labels.append(label)
            combo_g.append(float(gd))
        if condition_mode in ("opposite", "union"):
            combo_labels.append(1 - label)
            combo_g.append(float(gd))
    U = len(combo_g)
    assert U >= 1

    # ---- pad batch rows to a sublane-aligned row block ----
    Bp8 = ((B + 7) // 8) * 8
    if Bp8 <= MAX_ROW_BLOCK:
        row_block, Bp = Bp8, Bp8
    else:
        row_block = MAX_ROW_BLOCK
        Bp = ((Bp8 + MAX_ROW_BLOCK - 1) // MAX_ROW_BLOCK) * MAX_ROW_BLOCK
    pad = Bp - B

    edge_rows = edge_mtx.reshape(B, NN)                         # (B, N*N)
    yc = prep["label_emb"][jnp.stack(combo_labels, axis=0)]     # (U, B, Hp)
    if pad:
        edge_rows = jnp.pad(edge_rows, ((0, pad), (0, 0)))
        yc = jnp.pad(yc, ((0, 0), (0, pad), (0, 0)))

    # ---- one fused kernel: encode once + U guided denoise/decode passes ----
    z0, zf, dec = _fused_sample_call(edge_rows, yc, prep,
                                     denoise_steps, tuple(combo_g), row_block)

    h = z0[:B, :L]                                   # vae_encoder.encode_feat(edge_mtx)
    latents_u = zf[:, :B, :L]                        # (U, B, L)
    samples_u = dec[:, :B, :].reshape(U, B, N, N)    # symmetric, zero diagonal

    samples = [edge_mtx]
    labels_out = [label]
    latents = [h]
    for _ in range(sample_num):                      # deterministic sampler -> replicate
        for u in range(U):                           # same branch order as the reference
            samples.append(samples_u[u])
            labels_out.append(combo_labels[u])
            latents.append(latents_u[u])

    return (label,
            jnp.stack(samples, axis=1),
            jnp.stack(labels_out, axis=1),
            jnp.stack(latents, axis=1))


# ----------------------------------- main -----------------------------------

if __name__ == "__main__":
    B, N = 2, 16                 # batch, number of graph nodes
    LATENT, HIDDEN = 32, 64
    EDGE_DIM = N * (N - 1) // 2  # 120
    COND_SIZE = 8

    key = jax.random.PRNGKey(0)
    k_edge, k_cond, k_lbl, k_param = jax.random.split(key, 4)

    a = jax.random.normal(k_edge, (B, N, N), jnp.float32)
    edge_mtx = a + jnp.swapaxes(a, 1, 2)
    edge_mtx = edge_mtx * (1.0 - jnp.eye(N, dtype=jnp.float32))  # symmetric, zero diag
    condition = jax.random.normal(k_cond, (B, COND_SIZE), jnp.float32)
    label = jax.random.bernoulli(k_lbl, 0.5, (B,)).astype(jnp.int32)

    params = make_params(k_param, EDGE_DIM, LATENT, HIDDEN)
    prep = prepare_weights(params, N)   # once per checkpoint, outside the jitted forward

    out_label, out_samples, out_labels, out_latents = jax.block_until_ready(
        inference_predictor_forward(
            prep, edge_mtx, condition, label,
            condition_mode="union", sample_num=3, guidance_level=(0.5,),
            denoise_steps=4, latent_dim=LATENT))

    K = 1 + 3 * 1 * 2  # 1 original + sample_num * len(guidance) * 2 (union)
    assert out_samples.shape == (B, K, N, N)
    assert out_labels.shape == (B, K)
    assert out_latents.shape == (B, K, LATENT)
    print("KERNEL_OK")
</pallas_src>

<mosaic_0001>
module attributes {stable_mosaic.version = 11 : i64} {
  func.func @_fused_kernel(%arg0: i32, %arg1: memref<8x256xf32, #tpu.memory_space<vmem>>, %arg2: memref<2x8x128xf32, #tpu.memory_space<vmem>>, %arg3: memref<256x128xf32, #tpu.memory_space<vmem>>, %arg4: memref<1x128xf32, #tpu.memory_space<vmem>>, %arg5: memref<128x128xf32, #tpu.memory_space<vmem>>, %arg6: memref<1x128xf32, #tpu.memory_space<vmem>>, %arg7: memref<128x128xf32, #tpu.memory_space<vmem>>, %arg8: memref<1x128xf32, #tpu.memory_space<vmem>>, %arg9: memref<128x256xf32, #tpu.memory_space<vmem>>, %arg10: memref<1x256xf32, #tpu.memory_space<vmem>>, %arg11: memref<8x128xf32, #tpu.memory_space<vmem>>, %arg12: memref<2x8x128xf32, #tpu.memory_space<vmem>>, %arg13: memref<2x8x256xf32, #tpu.memory_space<vmem>>) attributes {dimension_semantics = [#tpu.dimension_semantics<parallel>], iteration_bounds = array<i64: 1>, scalar_prefetch = 0 : i64, scratch_operands = 0 : i64, tpu.core_type = #tpu.core_type<tc>, window_params = [{transform_indices = @transform_0, window_bounds = array<i64: 8, 256>}, {transform_indices = @transform_1, window_bounds = array<i64: 2, 8, 128>}, {pipeline_mode = #tpu.pipeline_mode<synchronous>, transform_indices = @transform_2, window_bounds = array<i64: 256, 128>}, {pipeline_mode = #tpu.pipeline_mode<synchronous>, transform_indices = @transform_3, window_bounds = array<i64: 1, 128>}, {pipeline_mode = #tpu.pipeline_mode<synchronous>, transform_indices = @transform_4, window_bounds = array<i64: 128, 128>}, {pipeline_mode = #tpu.pipeline_mode<synchronous>, transform_indices = @transform_5, window_bounds = array<i64: 1, 128>}, {pipeline_mode = #tpu.pipeline_mode<synchronous>, transform_indices = @transform_6, window_bounds = array<i64: 128, 128>}, {pipeline_mode = #tpu.pipeline_mode<synchronous>, transform_indices = @transform_7, window_bounds = array<i64: 1, 128>}, {pipeline_mode = #tpu.pipeline_mode<synchronous>, transform_indices = @transform_8, window_bounds = array<i64: 128, 256>}, {pipeline_mode = #tpu.pipeline_mode<synchronous>, transform_indices = @transform_9, window_bounds = array<i64: 1, 256>}, {transform_indices = @transform_10, window_bounds = array<i64: 8, 128>}, {transform_indices = @transform_11, window_bounds = array<i64: 2, 8, 128>}, {transform_indices = @transform_12, window_bounds = array<i64: 2, 8, 256>}]} {
    %c0 = arith.constant 0 : index
    %c0_0 = arith.constant 0 : index
    %0 = vector.load %arg1[%c0, %c0_0] : memref<8x256xf32, #tpu.memory_space<vmem>>, vector<8x256xf32>
    %c0_1 = arith.constant 0 : index
    %c0_2 = arith.constant 0 : index
    %1 = vector.load %arg3[%c0_1, %c0_2] : memref<256x128xf32, #tpu.memory_space<vmem>>, vector<256x128xf32>
    %cst = arith.constant dense<0.000000e+00> : vector<8x128xf32>
    %2 = tpu.matmul %0, %1, %cst {dimension_numbers = #tpu.dot_dimension_numbers<[1], [0], [0], [1], [0, 0, 1, 1], [], []>} : vector<8x256xf32>, vector<256x128xf32>, vector<8x128xf32> -> vector<8x128xf32>
    %c0_3 = arith.constant 0 : index
    %c0_4 = arith.constant 0 : index
    %3 = vector.load %arg4[%c0_3, %c0_4] : memref<1x128xf32, #tpu.memory_space<vmem>>, vector<1x128xf32>
    %4 = vector.broadcast %3 : vector<1x128xf32> to vector<8x128xf32>
    %5 = arith.addf %2, %4 : vector<8x128xf32>
    %c0_5 = arith.constant 0 : index
    %c0_6 = arith.constant 0 : index
    %6 = vector.load %arg11[%c0_5, %c0_6] : memref<8x128xf32, #tpu.memory_space<vmem>>, vector<8x128xf32>
    tpu.vector_store %arg11[%c0_5, %c0_6], %5 {strides = array<i32>} : memref<8x128xf32, #tpu.memory_space<vmem>>, vector<8x128xf32>,
    %c0_7 = arith.constant 0 : index
    %c0_8 = arith.constant 0 : index
    %7 = vector.load %arg5[%c0_7, %c0_8] : memref<128x128xf32, #tpu.memory_space<vmem>>, vector<128x128xf32>
    %c0_9 = arith.constant 0 : index
    %c0_10 = arith.constant 0 : index
    %8 = vector.load %arg6[%c0_9, %c0_10] : memref<1x128xf32, #tpu.memory_space<vmem>>, vector<1x128xf32>
    %c0_11 = arith.constant 0 : index
    %c0_12 = arith.constant 0 : index
    %9 = vector.load %arg7[%c0_11, %c0_12] : memref<128x128xf32, #tpu.memory_space<vmem>>, vector<128x128xf32>
    %c0_13 = arith.constant 0 : index
    %c0_14 = arith.constant 0 : index
    %10 = vector.load %arg8[%c0_13, %c0_14] : memref<1x128xf32, #tpu.memory_space<vmem>>, vector<1x128xf32>
    %c0_15 = arith.constant 0 : index
    %c0_16 = arith.constant 0 : index
    %11 = vector.load %arg9[%c0_15, %c0_16] : memref<128x256xf32, #tpu.memory_space<vmem>>, vector<128x256xf32>
    %c0_17 = arith.constant 0 : index
    %c0_18 = arith.constant 0 : index
    %12 = vector.load %arg10[%c0_17, %c0_18] : memref<1x256xf32, #tpu.memory_space<vmem>>, vector<1x256xf32>
    %c0_19 = arith.constant 0 : index
    %c0_20 = arith.constant 0 : index
    %c0_21 = arith.constant 0 : index
    %13 = vector.load %arg2[%c0_19, %c0_20, %c0_21] : memref<2x8x128xf32, #tpu.memory_space<vmem>>, vector<1x8x128xf32>
    %14 = vector.shape_cast %13 : vector<1x8x128xf32> to vector<8x128xf32>
    %c0_i32 = arith.constant 0 : i32
    %cst_22 = arith.constant dense<0.000000e+00> : vector<8x128xf32>
    %15 = tpu.matmul %5, %7, %cst_22 {dimension_numbers = #tpu.dot_dimension_numbers<[1], [0], [0], [1], [0, 0, 1, 1], [], []>} : vector<8x128xf32>, vector<128x128xf32>, vector<8x128xf32> -> vector<8x128xf32>
    %16 = vector.broadcast %8 : vector<1x128xf32> to vector<8x128xf32>
    %17 = arith.addf %15, %16 : vector<8x128xf32>
    %cst_23 = arith.constant 0.000000e+00 : f32
    %18 = vector.broadcast %cst_23 : f32 to vector<8x128xf32>
    %19 = arith.maximumf %17, %18 : vector<8x128xf32>
    %20 = arith.addf %17, %14 : vector<8x128xf32>
    %cst_24 = arith.constant 0.000000e+00 : f32
    %21 = vector.broadcast %cst_24 : f32 to vector<8x128xf32>
    %22 = arith.maximumf %20, %21 : vector<8x128xf32>
    %23 = arith.subf %22, %19 : vector<8x128xf32>
    %cst_25 = arith.constant 5.000000e-01 : f32
    %24 = vector.broadcast %cst_25 : f32 to vector<8x128xf32>
    %25 = arith.mulf %24, %23 : vector<8x128xf32>
    %26 = arith.addf %19, %25 : vector<8x128xf32>
    %cst_26 = arith.constant dense<0.000000e+00> : vector<8x128xf32>
    %27 = tpu.matmul %26, %9, %cst_26 {dimension_numbers = #tpu.dot_dimension_numbers<[1], [0], [0], [1], [0, 0, 1, 1], [], []>} : vector<8x128xf32>, vector<128x128xf32>, vector<8x128xf32> -> vector<8x128xf32>
    %28 = arith.addf %5, %27 : vector<8x128xf32>
    %29 = vector.broadcast %10 : vector<1x128xf32> to vector<8x128xf32>
    %30 = arith.addf %28, %29 : vector<8x128xf32>
    %c1_i32 = arith.constant 1 : i32
    %cst_27 = arith.constant dense<0.000000e+00> : vector<8x128xf32>
    %31 = tpu.matmul %30, %7, %cst_27 {dimension_numbers = #tpu.dot_dimension_numbers<[1], [0], [0], [1], [0, 0, 1, 1], [], []>} : vector<8x128xf32>, vector<128x128xf32>, vector<8x128xf32> -> vector<8x128xf32>
    %32 = vector.broadcast %8 : vector<1x128xf32> to vector<8x128xf32>
    %33 = arith.addf %31, %32 : vector<8x128xf32>
    %cst_28 = arith.constant 0.000000e+00 : f32
    %34 = vector.broadcast %cst_28 : f32 to vector<8x128xf32>
    %35 = arith.maximumf %33, %34 : vector<8x128xf32>
    %36 = arith.addf %33, %14 : vector<8x128xf32>
    %cst_29 = arith.constant 0.000000e+00 : f32
    %37 = vector.broadcast %cst_29 : f32 to vector<8x128xf32>
    %38 = arith.maximumf %36, %37 : vector<8x128xf32>
    %39 = arith.subf %38, %35 : vector<8x128xf32>
    %cst_30 = arith.constant 5.000000e-01 : f32
    %40 = vector.broadcast %cst_30 : f32 to vector<8x128xf32>
    %41 = arith.mulf %40, %39 : vector<8x128xf32>
    %42 = arith.addf %35, %41 : vector<8x128xf32>
    %cst_31 = arith.constant dense<0.000000e+00> : vector<8x128xf32>
    %43 = tpu.matmul %42, %9, %cst_31 {dimension_numbers = #tpu.dot_dimension_numbers<[1], [0], [0], [1], [0, 0, 1, 1], [], []>} : vector<8x128xf32>, vector<128x128xf32>, vector<8x128xf32> -> vector<8x128xf32>
    %44 = arith.addf %30, %43 : vector<8x128xf32>
    %45 = vector.broadcast %10 : vector<1x128xf32> to vector<8x128xf32>
    %46 = arith.addf %44, %45 : vector<8x128xf32>
    %c2_i32 = arith.constant 2 : i32
    %cst_32 = arith.constant dense<0.000000e+00> : vector<8x128xf32>
    %47 = tpu.matmul %46, %7, %cst_32 {dimension_numbers = #tpu.dot_dimension_numbers<[1], [0], [0], [1], [0, 0, 1, 1], [], []>} : vector<8x128xf32>, vector<128x128xf32>, vector<8x128xf32> -> vector<8x128xf32>
    %48 = vector.broadcast %8 : vector<1x128xf32> to vector<8x128xf32>
    %49 = arith.addf %47, %48 : vector<8x128xf32>
    %cst_33 = arith.constant 0.000000e+00 : f32
    %50 = vector.broadcast %cst_33 : f32 to vector<8x128xf32>
    %51 = arith.maximumf %49, %50 : vector<8x128xf32>
    %52 = arith.addf %49, %14 : vector<8x128xf32>
    %cst_34 = arith.constant 0.000000e+00 : f32
    %53 = vector.broadcast %cst_34 : f32 to vector<8x128xf32>
    %54 = arith.maximumf %52, %53 : vector<8x128xf32>
    %55 = arith.subf %54, %51 : vector<8x128xf32>
    %cst_35 = arith.constant 5.000000e-01 : f32
    %56 = vector.broadcast %cst_35 : f32 to vector<8x128xf32>
    %57 = arith.mulf %56, %55 : vector<8x128xf32>
    %58 = arith.addf %51, %57 : vector<8x128xf32>
    %cst_36 = arith.constant dense<0.000000e+00> : vector<8x128xf32>
    %59 = tpu.matmul %58, %9, %cst_36 {dimension_numbers = #tpu.dot_dimension_numbers<[1], [0], [0], [1], [0, 0, 1, 1], [], []>} : vector<8x128xf32>, vector<128x128xf32>, vector<8x128xf32> -> vector<8x128xf32>
    %60 = arith.addf %46, %59 : vector<8x128xf32>
    %61 = vector.broadcast %10 : vector<1x128xf32> to vector<8x128xf32>
    %62 = arith.addf %60, %61 : vector<8x128xf32>
    %c3_i32 = arith.constant 3 : i32
    %cst_37 = arith.constant dense<0.000000e+00> : vector<8x128xf32>
    %63 = tpu.matmul %62, %7, %cst_37 {dimension_numbers = #tpu.dot_dimension_numbers<[1], [0], [0], [1], [0, 0, 1, 1], [], []>} : vector<8x128xf32>, vector<128x128xf32>, vector<8x128xf32> -> vector<8x128xf32>
    %64 = vector.broadcast %8 : vector<1x128xf32> to vector<8x128xf32>
    %65 = arith.addf %63, %64 : vector<8x128xf32>
    %cst_38 = arith.constant 0.000000e+00 : f32
    %66 = vector.broadcast %cst_38 : f32 to vector<8x128xf32>
    %67 = arith.maximumf %65, %66 : vector<8x128xf32>
    %68 = arith.addf %65, %14 : vector<8x128xf32>
    %cst_39 = arith.constant 0.000000e+00 : f32
    %69 = vector.broadcast %cst_39 : f32 to vector<8x128xf32>
    %70 = arith.maximumf %68, %69 : vector<8x128xf32>
    %71 = arith.subf %70, %67 : vector<8x128xf32>
    %cst_40 = arith.constant 5.000000e-01 : f32
    %72 = vector.broadcast %cst_40 : f32 to vector<8x128xf32>
    %73 = arith.mulf %72, %71 : vector<8x128xf32>
    %74 = arith.addf %67, %73 : vector<8x128xf32>
    %cst_41 = arith.constant dense<0.000000e+00> : vector<8x128xf32>
    %75 = tpu.matmul %74, %9, %cst_41 {dimension_numbers = #tpu.dot_dimension_numbers<[1], [0], [0], [1], [0, 0, 1, 1], [], []>} : vector<8x128xf32>, vector<128x128xf32>, vector<8x128xf32> -> vector<8x128xf32>
    %76 = arith.addf %62, %75 : vector<8x128xf32>
    %77 = vector.broadcast %10 : vector<1x128xf32> to vector<8x128xf32>
    %78 = arith.addf %76, %77 : vector<8x128xf32>
    %c0_42 = arith.constant 0 : index
    %c0_43 = arith.constant 0 : index
    %c0_44 = arith.constant 0 : index
    %79 = vector.load %arg12[%c0_42, %c0_43, %c0_44] : memref<2x8x128xf32, #tpu.memory_space<vmem>>, vector<1x8x128xf32>
    %80 = vector.shape_cast %79 : vector<1x8x128xf32> to vector<8x128xf32>
    %81 = vector.shape_cast %78 : vector<8x128xf32> to vector<1x8x128xf32>
    tpu.vector_store %arg12[%c0_42, %c0_43, %c0_44], %81 {strides = array<i32>} : memref<2x8x128xf32, #tpu.memory_space<vmem>>, vector<1x8x128xf32>,
    %cst_45 = arith.constant dense<0.000000e+00> : vector<8x256xf32>
    %82 = tpu.matmul %78, %11, %cst_45 {dimension_numbers = #tpu.dot_dimension_numbers<[1], [0], [0], [1], [0, 0, 1, 1], [], []>} : vector<8x128xf32>, vector<128x256xf32>, vector<8x256xf32> -> vector<8x256xf32>
    %83 = vector.broadcast %12 : vector<1x256xf32> to vector<8x256xf32>
    %84 = arith.addf %82, %83 : vector<8x256xf32>
    %c0_46 = arith.constant 0 : index
    %c0_47 = arith.constant 0 : index
    %c0_48 = arith.constant 0 : index
    %85 = vector.load %arg13[%c0_46, %c0_47, %c0_48] : memref<2x8x256xf32, #tpu.memory_space<vmem>>, vector<1x8x256xf32>
    %86 = vector.shape_cast %85 : vector<1x8x256xf32> to vector<8x256xf32>
    %87 = vector.shape_cast %84 : vector<8x256xf32> to vector<1x8x256xf32>
    tpu.vector_store %arg13[%c0_46, %c0_47, %c0_48], %87 {strides = array<i32>} : memref<2x8x256xf32, #tpu.memory_space<vmem>>, vector<1x8x256xf32>,
    %c1 = arith.constant 1 : index
    %c0_49 = arith.constant 0 : index
    %c0_50 = arith.constant 0 : index
    %88 = vector.load %arg2[%c1, %c0_49, %c0_50] : memref<2x8x128xf32, #tpu.memory_space<vmem>>, vector<1x8x128xf32>
    %89 = vector.shape_cast %88 : vector<1x8x128xf32> to vector<8x128xf32>
    %c0_i32_51 = arith.constant 0 : i32
    %cst_52 = arith.constant dense<0.000000e+00> : vector<8x128xf32>
    %90 = tpu.matmul %5, %7, %cst_52 {dimension_numbers = #tpu.dot_dimension_numbers<[1], [0], [0], [1], [0, 0, 1, 1], [], []>} : vector<8x128xf32>, vector<128x128xf32>, vector<8x128xf32> -> vector<8x128xf32>
    %91 = vector.broadcast %8 : vector<1x128xf32> to vector<8x128xf32>
    %92 = arith.addf %90, %91 : vector<8x128xf32>
    %cst_53 = arith.constant 0.000000e+00 : f32
    %93 = vector.broadcast %cst_53 : f32 to vector<8x128xf32>
    %94 = arith.maximumf %92, %93 : vector<8x128xf32>
    %95 = arith.addf %92, %89 : vector<8x128xf32>
    %cst_54 = arith.constant 0.000000e+00 : f32
    %96 = vector.broadcast %cst_54 : f32 to vector<8x128xf32>
    %97 = arith.maximumf %95, %96 : vector<8x128xf32>
    %98 = arith.subf %97, %94 : vector<8x128xf32>
    %cst_55 = arith.constant 5.000000e-01 : f32
    %99 = vector.broadcast %cst_55 : f32 to vector<8x128xf32>
    %100 = arith.mulf %99, %98 : vector<8x128xf32>
    %101 = arith.addf %94, %100 : vector<8x128xf32>
    %cst_56 = arith.constant dense<0.000000e+00> : vector<8x128xf32>
    %102 = tpu.matmul %101, %9, %cst_56 {dimension_numbers = #tpu.dot_dimension_numbers<[1], [0], [0], [1], [0, 0, 1, 1], [], []>} : vector<8x128xf32>, vector<128x128xf32>, vector<8x128xf32> -> vector<8x128xf32>
    %103 = arith.addf %5, %102 : vector<8x128xf32>
    %104 = vector.broadcast %10 : vector<1x128xf32> to vector<8x128xf32>
    %105 = arith.addf %103, %104 : vector<8x128xf32>
    %c1_i32_57 = arith.constant 1 : i32
    %cst_58 = arith.constant dense<0.000000e+00> : vector<8x128xf32>
    %106 = tpu.matmul %105, %7, %cst_58 {dimension_numbers = #tpu.dot_dimension_numbers<[1], [0], [0], [1], [0, 0, 1, 1], [], []>} : vector<8x128xf32>, vector<128x128xf32>, vector<8x128xf32> -> vector<8x128xf32>
    %107 = vector.broadcast %8 : vector<1x128xf32> to vector<8x128xf32>
    %108 = arith.addf %106, %107 : vector<8x128xf32>
    %cst_59 = arith.constant 0.000000e+00 : f32
    %109 = vector.broadcast %cst_59 : f32 to vector<8x128xf32>
    %110 = arith.maximumf %108, %109 : vector<8x128xf32>
    %111 = arith.addf %108, %89 : vector<8x128xf32>
    %cst_60 = arith.constant 0.000000e+00 : f32
    %112 = vector.broadcast %cst_60 : f32 to vector<8x128xf32>
    %113 = arith.maximumf %111, %112 : vector<8x128xf32>
    %114 = arith.subf %113, %110 : vector<8x128xf32>
    %cst_61 = arith.constant 5.000000e-01 : f32
    %115 = vector.broadcast %cst_61 : f32 to vector<8x128xf32>
    %116 = arith.mulf %115, %114 : vector<8x128xf32>
    %117 = arith.addf %110, %116 : vector<8x128xf32>
    %cst_62 = arith.constant dense<0.000000e+00> : vector<8x128xf32>
    %118 = tpu.matmul %117, %9, %cst_62 {dimension_numbers = #tpu.dot_dimension_numbers<[1], [0], [0], [1], [0, 0, 1, 1], [], []>} : vector<8x128xf32>, vector<128x128xf32>, vector<8x128xf32> -> vector<8x128xf32>
    %119 = arith.addf %105, %118 : vector<8x128xf32>
    %120 = vector.broadcast %10 : vector<1x128xf32> to vector<8x128xf32>
    %121 = arith.addf %119, %120 : vector<8x128xf32>
    %c2_i32_63 = arith.constant 2 : i32
    %cst_64 = arith.constant dense<0.000000e+00> : vector<8x128xf32>
    %122 = tpu.matmul %121, %7, %cst_64 {dimension_numbers = #tpu.dot_dimension_numbers<[1], [0], [0], [1], [0, 0, 1, 1], [], []>} : vector<8x128xf32>, vector<128x128xf32>, vector<8x128xf32> -> vector<8x128xf32>
    %123 = vector.broadcast %8 : vector<1x128xf32> to vector<8x128xf32>
    %124 = arith.addf %122, %123 : vector<8x128xf32>
    %cst_65 = arith.constant 0.000000e+00 : f32
    %125 = vector.broadcast %cst_65 : f32 to vector<8x128xf32>
    %126 = arith.maximumf %124, %125 : vector<8x128xf32>
    %127 = arith.addf %124, %89 : vector<8x128xf32>
    %cst_66 = arith.constant 0.000000e+00 : f32
    %128 = vector.broadcast %cst_66 : f32 to vector<8x128xf32>
    %129 = arith.maximumf %127, %128 : vector<8x128xf32>
    %130 = arith.subf %129, %126 : vector<8x128xf32>
    %cst_67 = arith.constant 5.000000e-01 : f32
    %131 = vector.broadcast %cst_67 : f32 to vector<8x128xf32>
    %132 = arith.mulf %131, %130 : vector<8x128xf32>
    %133 = arith.addf %126, %132 : vector<8x128xf32>
    %cst_68 = arith.constant dense<0.000000e+00> : vector<8x128xf32>
    %134 = tpu.matmul %133, %9, %cst_68 {dimension_numbers = #tpu.dot_dimension_numbers<[1], [0], [0], [1], [0, 0, 1, 1], [], []>} : vector<8x128xf32>, vector<128x128xf32>, vector<8x128xf32> -> vector<8x128xf32>
    %135 = arith.addf %121, %134 : vector<8x128xf32>
    %136 = vector.broadcast %10 : vector<1x128xf32> to vector<8x128xf32>
    %137 = arith.addf %135, %136 : vector<8x128xf32>
    %c3_i32_69 = arith.constant 3 : i32
    %cst_70 = arith.constant dense<0.000000e+00> : vector<8x128xf32>
    %138 = tpu.matmul %137, %7, %cst_70 {dimension_numbers = #tpu.dot_dimension_numbers<[1], [0], [0], [1], [0, 0, 1, 1], [], []>} : vector<8x128xf32>, vector<128x128xf32>, vector<8x128xf32> -> vector<8x128xf32>
    %139 = vector.broadcast %8 : vector<1x128xf32> to vector<8x128xf32>
    %140 = arith.addf %138, %139 : vector<8x128xf32>
    %cst_71 = arith.constant 0.000000e+00 : f32
    %141 = vector.broadcast %cst_71 : f32 to vector<8x128xf32>
    %142 = arith.maximumf %140, %141 : vector<8x128xf32>
    %143 = arith.addf %140, %89 : vector<8x128xf32>
    %cst_72 = arith.constant 0.000000e+00 : f32
    %144 = vector.broadcast %cst_72 : f32 to vector<8x128xf32>
    %145 = arith.maximumf %143, %144 : vector<8x128xf32>
    %146 = arith.subf %145, %142 : vector<8x128xf32>
    %cst_73 = arith.constant 5.000000e-01 : f32
    %147 = vector.broadcast %cst_73 : f32 to vector<8x128xf32>
    %148 = arith.mulf %147, %146 : vector<8x128xf32>
    %149 = arith.addf %142, %148 : vector<8x128xf32>
    %cst_74 = arith.constant dense<0.000000e+00> : vector<8x128xf32>
    %150 = tpu.matmul %149, %9, %cst_74 {dimension_numbers = #tpu.dot_dimension_numbers<[1], [0], [0], [1], [0, 0, 1, 1], [], []>} : vector<8x128xf32>, vector<128x128xf32>, vector<8x128xf32> -> vector<8x128xf32>
    %151 = arith.addf %137, %150 : vector<8x128xf32>
    %152 = vector.broadcast %10 : vector<1x128xf32> to vector<8x128xf32>
    %153 = arith.addf %151, %152 : vector<8x128xf32>
    %c1_75 = arith.constant 1 : index
    %c0_76 = arith.constant 0 : index
    %c0_77 = arith.constant 0 : index
    %154 = vector.load %arg12[%c1_75, %c0_76, %c0_77] : memref<2x8x128xf32, #tpu.memory_space<vmem>>, vector<1x8x128xf32>
    %155 = vector.shape_cast %154 : vector<1x8x128xf32> to vector<8x128xf32>
    %156 = vector.shape_cast %153 : vector<8x128xf32> to vector<1x8x128xf32>
    tpu.vector_store %arg12[%c1_75, %c0_76, %c0_77], %156 {strides = array<i32>} : memref<2x8x128xf32, #tpu.memory_space<vmem>>, vector<1x8x128xf32>,
    %cst_78 = arith.constant dense<0.000000e+00> : vector<8x256xf32>
    %157 = tpu.matmul %153, %11, %cst_78 {dimension_numbers = #tpu.dot_dimension_numbers<[1], [0], [0], [1], [0, 0, 1, 1], [], []>} : vector<8x128xf32>, vector<128x256xf32>, vector<8x256xf32> -> vector<8x256xf32>
    %158 = vector.broadcast %12 : vector<1x256xf32> to vector<8x256xf32>
    %159 = arith.addf %157, %158 : vector<8x256xf32>
    %c1_79 = arith.constant 1 : index
    %c0_80 = arith.constant 0 : index
    %c0_81 = arith.constant 0 : index
    %160 = vector.load %arg13[%c1_79, %c0_80, %c0_81] : memref<2x8x256xf32, #tpu.memory_space<vmem>>, vector<1x8x256xf32>
    %161 = vector.shape_cast %160 : vector<1x8x256xf32> to vector<8x256xf32>
    %162 = vector.shape_cast %159 : vector<8x256xf32> to vector<1x8x256xf32>
    tpu.vector_store %arg13[%c1_79, %c0_80, %c0_81], %162 {strides = array<i32>} : memref<2x8x256xf32, #tpu.memory_space<vmem>>, vector<1x8x256xf32>,
    return
  }
  func.func @transform_0(%arg0: i32) -> (i32, i32) {
    %c0_i32 = arith.constant 0 : i32
    %c0_i32_0 = arith.constant 0 : i32
    return %arg0, %c0_i32 : i32, i32
  }
  func.func @transform_1(%arg0: i32) -> (i32, i32, i32) {
    %c0_i32 = arith.constant 0 : i32
    %c0_i32_0 = arith.constant 0 : i32
    %c0_i32_1 = arith.constant 0 : i32
    return %c0_i32, %arg0, %c0_i32_0 : i32, i32, i32
  }
  func.func @transform_2(%arg0: i32) -> (i32, i32) {
    %c0_i32 = arith.constant 0 : i32
    %c0_i32_0 = arith.constant 0 : i32
    %c0_i32_1 = arith.constant 0 : i32
    return %c0_i32, %c0_i32_0 : i32, i32
  }
  func.func @transform_3(%arg0: i32) -> (i32, i32) {
    %c0_i32 = arith.constant 0 : i32
    %c0_i32_0 = arith.constant 0 : i32
    %c0_i32_1 = arith.constant 0 : i32
    return %c0_i32, %c0_i32_0 : i32, i32
  }
  func.func @transform_4(%arg0: i32) -> (i32, i32) {
    %c0_i32 = arith.constant 0 : i32
    %c0_i32_0 = arith.constant 0 : i32
    %c0_i32_1 = arith.constant 0 : i32
    return %c0_i32, %c0_i32_0 : i32, i32
  }
  func.func @transform_5(%arg0: i32) -> (i32, i32) {
    %c0_i32 = arith.constant 0 : i32
    %c0_i32_0 = arith.constant 0 : i32
    %c0_i32_1 = arith.constant 0 : i32
    return %c0_i32, %c0_i32_0 : i32, i32
  }
  func.func @transform_6(%arg0: i32) -> (i32, i32) {
    %c0_i32 = arith.constant 0 : i32
    %c0_i32_0 = arith.constant 0 : i32
    %c0_i32_1 = arith.constant 0 : i32
    return %c0_i32, %c0_i32_0 : i32, i32
  }
  func.func @transform_7(%arg0: i32) -> (i32, i32) {
    %c0_i32 = arith.constant 0 : i32
    %c0_i32_0 = arith.constant 0 : i32
    %c0_i32_1 = arith.constant 0 : i32
    return %c0_i32, %c0_i32_0 : i32, i32
  }
  func.func @transform_8(%arg0: i32) -> (i32, i32) {
    %c0_i32 = arith.constant 0 : i32
    %c0_i32_0 = arith.constant 0 : i32
    %c0_i32_1 = arith.constant 0 : i32
    return %c0_i32, %c0_i32_0 : i32, i32
  }
  func.func @transform_9(%arg0: i32) -> (i32, i32) {
    %c0_i32 = arith.constant 0 : i32
    %c0_i32_0 = arith.constant 0 : i32
    %c0_i32_1 = arith.constant 0 : i32
    return %c0_i32, %c0_i32_0 : i32, i32
  }
  func.func @transform_10(%arg0: i32) -> (i32, i32) {
    %c0_i32 = arith.constant 0 : i32
    %c0_i32_0 = arith.constant 0 : i32
    return %arg0, %c0_i32 : i32, i32
  }
  func.func @transform_11(%arg0: i32) -> (i32, i32, i32) {
    %c0_i32 = arith.constant 0 : i32
    %c0_i32_0 = arith.constant 0 : i32
    %c0_i32_1 = arith.constant 0 : i32
    return %c0_i32, %arg0, %c0_i32_0 : i32, i32, i32
  }
  func.func @transform_12(%arg0: i32) -> (i32, i32, i32) {
    %c0_i32 = arith.constant 0 : i32
    %c0_i32_0 = arith.constant 0 : i32
    %c0_i32_1 = arith.constant 0 : i32
    return %c0_i32, %arg0, %c0_i32_0 : i32, i32, i32
  }
}

</mosaic_0001>

<llo_original>
// kernel: squeeze.12
$region0: #{squeeze.12}
  %s0 = inlined_call_operand.vmem [shape: f32[1,2,256], index: 0, kind: input, shape index: {}]
  %s1 = inlined_call_operand.vmem [shape: f32[2,1,16,16], index: 1, kind: output, shape index: {}]
  $region1: #{squeeze.12} parent=0
    #allocation0 [shape = 'u8[8192]{0}', space=vmem, size = 0x2000, scoped, tag = 'scoped mem for input reshape']
    %s3 = sshll.u32 1, 2
    %s4 = ssub.s32 %s3, 1
    %s5 = scalar_lea.vmem %s0, 2
    %v6 = vld [vmem:[%s5] sm:%s4]
    %s7 = scalar_lea.vmem [#allocation0], 8
    %8 = vst [vmem:[%s7] sm:%s4] %v6
    %v9 = vld [vmem:[%s0] sm:%s4]
    %10 = vst [vmem:[#allocation0] sm:%s4] %v9
    %v11 = vld [vmem:[#allocation0] sm:$0x3]
    %vm12 = vcmask 130048
    %13 = vst.msk [vmem:[%s1] ss:$16 sm:$0x3] %vm12, %v11
    %s14 = scalar_lea.vmem [#allocation0], 8
    %v15 = vld [vmem:[%s14] sm:$0x3]
    %vm16 = vcmask 130048
    %s17 = scalar_lea.vmem %s1, 8
    %18 = vst.msk [vmem:[%s17] ss:$16 sm:$0x3] %vm16, %v15
    %v19 = vld.sshfl [vmem:[#allocation0] sm:$0xff pattern:$0x99999180]
    %20 = vrot.lane.b32.xlu0 %v19, 112
    %v21 = vpop.permute.xlu0 %20
    %vm22 = vcmask 130048
    %s23 = scalar_lea.vmem %s1, 1
    %24 = vst.msk [vmem:[%s23] ss:$8 sm:$0xf] %vm22, %v21
    %v25 = vld.sshfl [vmem:[#allocation0] sm:$0xff pattern:$0x99999180]
    %26 = vrot.lane.b32.xlu0 %v25, 96
    %v27 = vpop.permute.xlu0 %26
    %vm28 = vcmask 130048
    %s29 = scalar_lea.vmem %s1, 2
    %30 = vst.msk [vmem:[%s29] ss:$8 sm:$0xf] %vm28, %v27
    %v31 = vld.sshfl [vmem:[#allocation0] sm:$0xff pattern:$0x99999180]
    %32 = vrot.lane.b32.xlu0 %v31, 80
    %v33 = vpop.permute.xlu0 %32
    %vm34 = vcmask 130048
    %s35 = scalar_lea.vmem %s1, 3
    %36 = vst.msk [vmem:[%s35] ss:$8 sm:$0xf] %vm34, %v33
    %v37 = vld.sshfl [vmem:[#allocation0] sm:$0xff pattern:$0x99999180]
    %38 = vrot.lane.b32.xlu0 %v37, 64
    %v39 = vpop.permute.xlu0 %38
    %vm40 = vcmask 130048
    %s41 = scalar_lea.vmem %s1, 4
    %42 = vst.msk [vmem:[%s41] ss:$8 sm:$0xf] %vm40, %v39
    %v43 = vld.sshfl [vmem:[#allocation0] sm:$0xff pattern:$0x99999180]
    %44 = vrot.lane.b32.xlu0 %v43, 48
    %v45 = vpop.permute.xlu0 %44
    %vm46 = vcmask 130048
    %s47 = scalar_lea.vmem %s1, 5
    %48 = vst.msk [vmem:[%s47] ss:$8 sm:$0xf] %vm46, %v45
    %v49 = vld.sshfl [vmem:[#allocation0] sm:$0xff pattern:$0x99999180]
    %50 = vrot.lane.b32.xlu0 %v49, 32
    %v51 = vpop.permute.xlu0 %50
    %vm52 = vcmask 130048
    %s53 = scalar_lea.vmem %s1, 6
    %54 = vst.msk [vmem:[%s53] ss:$8 sm:$0xf] %vm52, %v51
    %v55 = vld.sshfl [vmem:[#allocation0] sm:$0xff pattern:$0x99999180]
    %56 = vrot.lane.b32.xlu0 %v55, 16
    %v57 = vpop.permute.xlu0 %56
    %vm58 = vcmask 130048
    %s59 = scalar_lea.vmem %s1, 7
    %60 = vst.msk [vmem:[%s59] ss:$8 sm:$0xf] %vm58, %v57

// kernel: inference_predictor_forward.1
$region0: #{inference_predictor_forward.1}
  #allocation0 [shape = 'u32[]', space=smem, size = 0x4, offset = 0x4, fixed_abs, tag = 'smem constant byte address 0x4 - core index']
  #allocation1 [shape = 'u32[144,128]{1,0:T(1,128)}', space=vmem, size = 0x12000, scoped, tag = 'internal scratch']
  %s0 = inlined_call_operand.vmem [shape: f32[8,256], index: 0, kind: input, shape index: {}]
  %s1 = inlined_call_operand.vmem [shape: f32[2,8,128], index: 1, kind: input, shape index: {}]
  %s2 = inlined_call_operand.hbm [shape: f32[256,128], index: 2, kind: input, shape index: {}]
  %s3 = inlined_call_operand.vmem [shape: f32[1,128], index: 3, kind: input, shape index: {}]
  %s4 = inlined_call_operand.vmem [shape: f32[128,128], index: 4, kind: input, shape index: {}]
  %s5 = inlined_call_operand.vmem [shape: f32[1,128], index: 5, kind: input, shape index: {}]
  %s6 = inlined_call_operand.hbm [shape: f32[128,128], index: 6, kind: input, shape index: {}]
  %s7 = inlined_call_operand.vmem [shape: f32[1,128], index: 7, kind: input, shape index: {}]
  %s8 = inlined_call_operand.hbm [shape: f32[128,256], index: 8, kind: input, shape index: {}]
  %s9 = inlined_call_operand.vmem [shape: f32[1,256], index: 9, kind: input, shape index: {}]
  %s10 = inlined_call_operand.vmem [shape: f32[8,128], index: 10, kind: output, shape index: {0}]
  %s11 = inlined_call_operand.vmem [shape: f32[2,8,128], index: 11, kind: output, shape index: {1}]
  %s12 = inlined_call_operand.vmem [shape: f32[2,8,256], index: 12, kind: output, shape index: {2}]
  %13 = xla_tuple %s10, %s11, %s12
  %s14 = sld [smem:[#allocation0]]
  $region78: #{inference_predictor_forward.1} parent=0
    _
  %s16 = ssub.s32 1, %s14
  %s17 = scalar_select 0, %s16, %s14
  $region1: #{inference_predictor_forward.1} parent=0
    #allocation2 [shape = 'u8[131072]{0}', space=vmem, size = 0x20000, scoped, tag = 'input window, operand 2, single buffered']
    #allocation3 [shape = 's32[1]{0}', space=sflag, size = 0x4, scoped, tag = 'scoped memory for inference_predictor_forward.1']
    #allocation4 [shape = 'u8[65536]{0}', space=vmem, size = 0x10000, scoped, tag = 'input window, operand 6, single buffered']
    #allocation5 [shape = 's32[1]{0}', space=sflag, size = 0x4, scoped, tag = 'scoped memory for inference_predictor_forward.1']
    #allocation6 [shape = 'u8[131072]{0}', space=vmem, size = 0x20000, scoped, tag = 'input window, operand 8, single buffered']
    %18 = vsyncpa [#allocation3], 0
    %19 = vsyncpa [#allocation5], 0
    // Predicated region
    $region2: #{inference_predictor_forward.1} parent=1 // pred_check
      _
    $region3: #{inference_predictor_forward.1} parent=1 // pred_check_branch
      %21 = sbr.rel (0) target = $region5
    $region4: #{inference_predictor_forward.1} parent=1 // pred_region
      _
    $region5: #{inference_predictor_forward.1} parent=1 // pred_fallthru
      _
    // Predicated region
    $region6: #{inference_predictor_forward.1} parent=1 // pred_check
      _
    $region7: #{inference_predictor_forward.1} parent=1 // pred_check_branch
      %23 = sbr.rel (0) target = $region9
    $region8: #{inference_predictor_forward.1} parent=1 // pred_region
      _
    $region9: #{inference_predictor_forward.1} parent=1 // pred_fallthru
      _
    // Predicated region
    $region10: #{inference_predictor_forward.1} parent=1 // pred_check
      _
    $region11: #{inference_predictor_forward.1} parent=1 // pred_check_branch
      %25 = sbr.rel (0) target = $region13
    $region12: #{inference_predictor_forward.1} parent=1 // pred_region
      %s27 = ssub.s32 4096, 4096
      %28 = vsyncadd [#allocation3], %s27
      %s29 = sshll.u32 [#allocation2], 4
      %s30 = int_to_ptr.vmem [resolvable:$true] %s29
      %35 = dma.hbm_to_vmem [thread:$0]  %s2, 4096, %s30, [#allocation3], 128, 128, 8
    $region13: #{inference_predictor_forward.1} parent=1 // pred_fallthru
      _
    // Predicated region
    $region14: #{inference_predictor_forward.1} parent=1 // pred_check
      _
    $region15: #{inference_predictor_forward.1} parent=1 // pred_check_branch
      %37 = sbr.rel (0) target = $region17
    $region16: #{inference_predictor_forward.1} parent=1 // pred_region
      _
    $region17: #{inference_predictor_forward.1} parent=1 // pred_fallthru
      _
    // Predicated region
    $region18: #{inference_predictor_forward.1} parent=1 // pred_check
      _
    $region19: #{inference_predictor_forward.1} parent=1 // pred_check_branch
      %39 = sbr.rel (0) target = $region21
    $region20: #{inference_predictor_forward.1} parent=1 // pred_region
      _
    $region21: #{inference_predictor_forward.1} parent=1 // pred_fallthru
      _
    // Predicated region
    $region22: #{inference_predictor_forward.1} parent=1 // pred_check
      _
    $region23: #{inference_predictor_forward.1} parent=1 // pred_check_branch
      %41 = sbr.rel (0) target = $region25
    $region24: #{inference_predictor_forward.1} parent=1 // pred_region
      _
    $region25: #{inference_predictor_forward.1} parent=1 // pred_fallthru
      _
    // Predicated region
    $region26: #{inference_predictor_forward.1} parent=1 // pred_check
      _
    $region27: #{inference_predictor_forward.1} parent=1 // pred_check_branch
      %43 = sbr.rel (0) target = $region29
    $region28: #{inference_predictor_forward.1} parent=1 // pred_region
      %s45 = ssub.s32 2048, 2048
      %46 = vsyncadd [#allocation5], %s45
      %s47 = sshll.u32 [#allocation4], 4
      %s48 = int_to_ptr.vmem [resolvable:$true] %s47
      %53 = dma.hbm_to_vmem [thread:$0]  %s6, 2048, %s48, [#allocation5], 128, 128, 8
    $region29: #{inference_predictor_forward.1} parent=1 // pred_fallthru
      _
    // Predicated region
    $region30: #{inference_predictor_forward.1} parent=1 // pred_check
      _
    $region31: #{inference_predictor_forward.1} parent=1 // pred_check_branch
      %55 = sbr.rel (0) target = $region33
    $region32: #{inference_predictor_forward.1} parent=1 // pred_region
      _
    $region33: #{inference_predictor_forward.1} parent=1 // pred_fallthru
      _
    // Predicated region
    $region34: #{inference_predictor_forward.1} parent=1 // pred_check
      _
    $region35: #{inference_predictor_forward.1} parent=1 // pred_check_branch
      %57 = sbr.rel (0) target = $region37
    $region36: #{inference_predictor_forward.1} parent=1 // pred_region
      %s59 = ssub.s32 4096, 4096
      %60 = vsyncadd [#allocation5], %s59
      %s61 = sshll.u32 [#allocation6], 4
      %s62 = int_to_ptr.vmem [resolvable:$true] %s61
      %67 = dma.hbm_to_vmem [thread:$0]  %s8, 4096, %s62, [#allocation5], 256, 256, 16
    $region37: #{inference_predictor_forward.1} parent=1 // pred_fallthru
      _
    // Predicated region
    $region38: #{inference_predictor_forward.1} parent=1 // pred_check
      _
    $region39: #{inference_predictor_forward.1} parent=1 // pred_check_branch
      %69 = sbr.rel (0) target = $region41
    $region40: #{inference_predictor_forward.1} parent=1 // pred_region
      _
    $region41: #{inference_predictor_forward.1} parent=1 // pred_fallthru
      _
    // Predicated region
    $region42: #{inference_predictor_forward.1} parent=1 // pred_check
      _
    $region43: #{inference_predictor_forward.1} parent=1 // pred_check_branch
      %71 = sbr.rel (0) target = $region45
    $region44: #{inference_predictor_forward.1} parent=1 // pred_region
      %72 = dma.done [#allocation3], 4096
    $region45: #{inference_predictor_forward.1} parent=1 // pred_fallthru
      _
    // Predicated region
    $region46: #{inference_predictor_forward.1} parent=1 // pred_check
      _
    $region47: #{inference_predictor_forward.1} parent=1 // pred_check_branch
      %74 = sbr.rel (0) target = $region49
    $region48: #{inference_predictor_forward.1} parent=1 // pred_region
      %75 = dma.done [#allocation5], 2048
    $region49: #{inference_predictor_forward.1} parent=1 // pred_fallthru
      _
    // Predicated region
    $region50: #{inference_predictor_forward.1} parent=1 // pred_check
      _
    $region51: #{inference_predictor_forward.1} parent=1 // pred_check_branch
      %77 = sbr.rel (0) target = $region53
    $region52: #{inference_predictor_forward.1} parent=1 // pred_region
      %78 = dma.done [#allocation5], 4096
    $region53: #{inference_predictor_forward.1} parent=1 // pred_fallthru
      _
    %v79 = vld [vmem:[%s0] sm:$0xff]
    %v80 = vld [vmem:[%s0 + $0x8] sm:$0xff]
    %v81 = vld [vmem:[#allocation2] sm:$0xff]
    %v82 = vld [vmem:[#allocation2 + $0x8] sm:$0xff]
    %v83 = vld [vmem:[#allocation2 + $0x10] sm:$0xff]
    %v84 = vld [vmem:[#allocation2 + $0x18] sm:$0xff]
    %v85 = vld [vmem:[#allocation2 + $0x20] sm:$0xff]
    %v86 = vld [vmem:[#allocation2 + $0x28] sm:$0xff]
    %v87 = vld [vmem:[#allocation2 + $0x30] sm:$0xff]
    %v88 = vld [vmem:[#allocation2 + $0x38] sm:$0xff]
    %v89 = vld [vmem:[#allocation2 + $0x40] sm:$0xff]
    %v90 = vld [vmem:[#allocation2 + $0x48] sm:$0xff]
    %v91 = vld [vmem:[#allocation2 + $0x50] sm:$0xff]
    %v92 = vld [vmem:[#allocation2 + $0x58] sm:$0xff]
    %v93 = vld [vmem:[#allocation2 + $0x60] sm:$0xff]
    %v94 = vld [vmem:[#allocation2 + $0x68] sm:$0xff]
    %v95 = vld [vmem:[#allocation2 + $0x70] sm:$0xff]
    %v96 = vld [vmem:[#allocation2 + $0x78] sm:$0xff]
    %v97 = vld [vmem:[#allocation2 + $0x80] sm:$0xff]
    %v98 = vld [vmem:[#allocation2 + $0x88] sm:$0xff]
    %v99 = vld [vmem:[#allocation2 + $0x90] sm:$0xff]
    %v100 = vld [vmem:[#allocation2 + $0x98] sm:$0xff]
    %v101 = vld [vmem:[#allocation2 + $0xa0] sm:$0xff]
    %v102 = vld [vmem:[#allocation2 + $0xa8] sm:$0xff]
    %v103 = vld [vmem:[#allocation2 + $0xb0] sm:$0xff]
    %v104 = vld [vmem:[#allocation2 + $0xb8] sm:$0xff]
    %v105 = vld [vmem:[#allocation2 + $0xc0] sm:$0xff]
    %v106 = vld [vmem:[#allocation2 + $0xc8] sm:$0xff]
    %v107 = vld [vmem:[#allocation2 + $0xd0] sm:$0xff]
    %v108 = vld [vmem:[#allocation2 + $0xd8] sm:$0xff]
    %v109 = vld [vmem:[#allocation2 + $0xe0] sm:$0xff]
    %v110 = vld [vmem:[#allocation2 + $0xe8] sm:$0xff]
    %v111 = vld [vmem:[#allocation2 + $0xf0] sm:$0xff]
    %v112 = vld [vmem:[#allocation2 + $0xf8] sm:$0xff]
    %v113 = vld [vmem:[%s3] sm:$0x1]
    %v115 = vlaneseq
    %v116 = vshrl.u32 %v115, 7
    %v117 = vsub.s32 0, %v116
    %v118 = vrot.slane %v113, %v117
    %120 = vmatprep.subr.mxu0 0.0
    %121 = vmatpush1.msra.mxu0 %v96
    %122 = vmatprep.subr.mxu0 0.0
    %123 = vmatpush1.msra.mxu0 %v95
    %124 = vmatprep.subr.mxu0 0.0
    %125 = vmatpush1.msra.mxu0 %v94
    %126 = vmatprep.subr.mxu0 0.0
    %127 = vmatpush1.msra.mxu0 %v93
    %128 = vmatprep.subr.mxu0 0.0
    %129 = vmatpush1.msra.mxu0 %v92
    %130 = vmatprep.subr.mxu0 0.0
    %131 = vmatpush1.msra.mxu0 %v91
    %132 = vmatprep.subr.mxu0 0.0
    %133 = vmatpush1.msra.mxu0 %v90
    %134 = vmatprep.subr.mxu0 0.0
    %135 = vmatpush1.msra.mxu0 %v89
    %136 = vmatprep.subr.mxu0 0.0
    %137 = vmatpush1.msra.mxu0 %v88
    %138 = vmatprep.subr.mxu0 0.0
    %139 = vmatpush1.msra.mxu0 %v87
    %140 = vmatprep.subr.mxu0 0.0
    %141 = vmatpush1.msra.mxu0 %v86
    %142 = vmatprep.subr.mxu0 0.0
    %143 = vmatpush1.msra.mxu0 %v85
    %144 = vmatprep.subr.mxu0 0.0
    %145 = vmatpush1.msra.mxu0 %v84
    %146 = vmatprep.subr.mxu0 0.0
    %147 = vmatpush1.msra.mxu0 %v83
    %148 = vmatprep.subr.mxu0 0.0
    %149 = vmatpush1.msra.mxu0 %v82
    %150 = vmatprep.subr.mxu0 0.0
    %151 = vmatpush1.msra.mxu0 %v81
    %152 = vmatprep.subr.mxu0 0.0
    %153 = vmatpush2.msra.mxu0 %v112
    %154 = vmatprep.subr.mxu0 0.0
    %155 = vmatpush2.msra.mxu0 %v111
    %156 = vmatprep.subr.mxu0 0.0
    %157 = vmatpush2.msra.mxu0 %v110
    %158 = vmatprep.subr.mxu0 0.0
    %159 = vmatpush2.msra.mxu0 %v109
    %160 = vmatprep.subr.mxu0 0.0
    %161 = vmatpush2.msra.mxu0 %v108
    %162 = vmatprep.subr.mxu0 0.0
    %163 = vmatpush2.msra.mxu0 %v107
    %164 = vmatprep.subr.mxu0 0.0
    %165 = vmatpush2.msra.mxu0 %v106
    %166 = vmatprep.subr.mxu0 0.0
    %167 = vmatpush2.msra.mxu0 %v105
    %168 = vmatprep.subr.mxu0 0.0
    %169 = vmatpush2.msra.mxu0 %v104
    %170 = vmatprep.subr.mxu0 0.0
    %171 = vmatpush2.msra.mxu0 %v103
    %172 = vmatprep.subr.mxu0 0.0
    %173 = vmatpush2.msra.mxu0 %v102
    %174 = vmatprep.subr.mxu0 0.0
    %175 = vmatpush2.msra.mxu0 %v101
    %176 = vmatprep.subr.mxu0 0.0
    %177 = vmatpush2.msra.mxu0 %v100
    %178 = vmatprep.subr.mxu0 0.0
    %179 = vmatpush2.msra.mxu0 %v99
    %180 = vmatprep.subr.mxu0 0.0
    %181 = vmatpush2.msra.mxu0 %v98
    %182 = vmatprep.subr.mxu0 0.0
    %183 = vmatpush2.msra.mxu0 %v97
    %184 = vmatprep.mubr.f32.mxu0 %v80
    %185 = vmatmul.mubr.f32.gmra.mxu0 %v79
    %v186 = vpop.f32.mrf.mxu0
    %v187 = vadd.f32 %v118, %v186
    %v188 = vpop.f32.mrf.mxu0
    %189 = vdwg.mxu0
    %190 = vst [vmem:[%s10] sm:$0xff] %v187
    %v191 = vld [vmem:[%s4] sm:$0xff]
    %v192 = vld [vmem:[%s4 + $0x8] sm:$0xff]
    %v193 = vld [vmem:[%s4 + $0x10] sm:$0xff]
    %v194 = vld [vmem:[%s4 + $0x18] sm:$0xff]
    %v195 = vld [vmem:[%s4 + $0x20] sm:$0xff]
    %v196 = vld [vmem:[%s4 + $0x28] sm:$0xff]
    %v197 = vld [vmem:[%s4 + $0x30] sm:$0xff]
    %v198 = vld [vmem:[%s4 + $0x38] sm:$0xff]
    %v199 = vld [vmem:[%s4 + $0x40] sm:$0xff]
    %v200 = vld [vmem:[%s4 + $0x48] sm:$0xff]
    %v201 = vld [vmem:[%s4 + $0x50] sm:$0xff]
    %v202 = vld [vmem:[%s4 + $0x58] sm:$0xff]
    %v203 = vld [vmem:[%s4 + $0x60] sm:$0xff]
    %v204 = vld [vmem:[%s4 + $0x68] sm:$0xff]
    %v205 = vld [vmem:[%s4 + $0x70] sm:$0xff]
    %v206 = vld [vmem:[%s4 + $0x78] sm:$0xff]
    %v207 = vld [vmem:[%s5] sm:$0x1]
    %v208 = vld [vmem:[#allocation4] sm:$0xff]
    %v209 = vld [vmem:[#allocation4 + $0x8] sm:$0xff]
    %v210 = vld [vmem:[#allocation4 + $0x10] sm:$0xff]
    %v211 = vld [vmem:[#allocation4 + $0x18] sm:$0xff]
    %v212 = vld [vmem:[#allocation4 + $0x20] sm:$0xff]
    %v213 = vld [vmem:[#allocation4 + $0x28] sm:$0xff]
    %v214 = vld [vmem:[#allocation4 + $0x30] sm:$0xff]
    %v215 = vld [vmem:[#allocation4 + $0x38] sm:$0xff]
    %v216 = vld [vmem:[#allocation4 + $0x40] sm:$0xff]
    %v217 = vld [vmem:[#allocation4 + $0x48] sm:$0xff]
    %v218 = vld [vmem:[#allocation4 + $0x50] sm:$0xff]
    %v219 = vld [vmem:[#allocation4 + $0x58] sm:$0xff]
    %v220 = vld [vmem:[#allocation4 + $0x60] sm:$0xff]
    %v221 = vld [vmem:[#allocation4 + $0x68] sm:$0xff]
    %v222 = vld [vmem:[#allocation4 + $0x70] sm:$0xff]
    %v223 = vld [vmem:[#allocation4 + $0x78] sm:$0xff]
    %v224 = vld [vmem:[%s7] sm:$0x1]
    %v225 = vld [vmem:[#allocation6] sm:$0xff]
    %v226 = vld [vmem:[#allocation6 + $0x8] sm:$0xff]
    %v227 = vld [vmem:[#allocation6 + $0x10] sm:$0xff]
    %v228 = vld [vmem:[#allocation6 + $0x18] sm:$0xff]
    %v229 = vld [vmem:[#allocation6 + $0x20] sm:$0xff]
    %v230 = vld [vmem:[#allocation6 + $0x28] sm:$0xff]
    %v231 = vld [vmem:[#allocation6 + $0x30] sm:$0xff]
    %v232 = vld [vmem:[#allocation6 + $0x38] sm:$0xff]
    %v233 = vld [vmem:[#allocation6 + $0x40] sm:$0xff]
    %v234 = vld [vmem:[#allocation6 + $0x48] sm:$0xff]
    %v235 = vld [vmem:[#allocation6 + $0x50] sm:$0xff]
    %v236 = vld [vmem:[#allocation6 + $0x58] sm:$0xff]
    %v237 = vld [vmem:[#allocation6 + $0x60] sm:$0xff]
    %v238 = vld [vmem:[#allocation6 + $0x68] sm:$0xff]
    %v239 = vld [vmem:[#allocation6 + $0x70] sm:$0xff]
    %v240 = vld [vmem:[#allocation6 + $0x78] sm:$0xff]
    %v241 = vld [vmem:[#allocation6 + $0x80] sm:$0xff]
    %v242 = vld [vmem:[#allocation6 + $0x88] sm:$0xff]
    %v243 = vld [vmem:[#allocation6 + $0x90] sm:$0xff]
    %v244 = vld [vmem:[#allocation6 + $0x98] sm:$0xff]
    %v245 = vld [vmem:[#allocation6 + $0xa0] sm:$0xff]
    %v246 = vld [vmem:[#allocation6 + $0xa8] sm:$0xff]
    %v247 = vld [vmem:[#allocation6 + $0xb0] sm:$0xff]
    %v248 = vld [vmem:[#allocation6 + $0xb8] sm:$0xff]
    %v249 = vld [vmem:[#allocation6 + $0xc0] sm:$0xff]
    %v250 = vld [vmem:[#allocation6 + $0xc8] sm:$0xff]
    %v251 = vld [vmem:[#allocation6 + $0xd0] sm:$0xff]
    %v252 = vld [vmem:[#allocation6 + $0xd8] sm:$0xff]
    %v253 = vld [vmem:[#allocation6 + $0xe0] sm:$0xff]
    %v254 = vld [vmem:[#allocation6 + $0xe8] sm:$0xff]
    %v255 = vld [vmem:[#allocation6 + $0xf0] sm:$0xff]
    %v256 = vld [vmem:[#allocation6 + $0xf8] sm:$0xff]
    %v257 = vld [vmem:[%s9] sm:$0x3]
    %v258 = vld [vmem:[%s1] sm:$0xff]
    %v260 = vlaneseq
    %v261 = vshrl.u32 %v260, 7
    %v262 = vsub.s32 0, %v261
    %v263 = vrot.slane %v207, %v262
    %265 = vmatprep.subr.mxu0 0.0
    %266 = vmatpush1.msra.mxu0 %v206
    %267 = vmatprep.subr.mxu0 0.0
    %268 = vmatpush1.msra.mxu0 %v205
    %269 = vmatprep.subr.mxu0 0.0
    %270 = vmatpush1.msra.mxu0 %v204
    %271 = vmatprep.subr.mxu0 0.0
    %272 = vmatpush1.msra.mxu0 %v203
    %273 = vmatprep.subr.mxu0 0.0
    %274 = vmatpush1.msra.mxu0 %v202
    %275 = vmatprep.subr.mxu0 0.0
    %276 = vmatpush1.msra.mxu0 %v201
    %277 = vmatprep.subr.mxu0 0.0
    %278 = vmatpush1.msra.mxu0 %v200
    %279 = vmatprep.subr.mxu0 0.0
    %280 = vmatpush1.msra.mxu0 %v199
    %281 = vmatprep.subr.mxu0 0.0
    %282 = vmatpush1.msra.mxu0 %v198
    %283 = vmatprep.subr.mxu0 0.0
    %284 = vmatpush1.msra.mxu0 %v197
    %285 = vmatprep.subr.mxu0 0.0
    %286 = vmatpush1.msra.mxu0 %v196
    %287 = vmatprep.subr.mxu0 0.0
    %288 = vmatpush1.msra.mxu0 %v195
    %289 = vmatprep.subr.mxu0 0.0
    %290 = vmatpush1.msra.mxu0 %v194
    %291 = vmatprep.subr.mxu0 0.0
    %292 = vmatpush1.msra.mxu0 %v193
    %293 = vmatprep.subr.mxu0 0.0
    %294 = vmatpush1.msra.mxu0 %v192
    %295 = vmatprep.subr.mxu0 0.0
    %296 = vmatpush1.msra.mxu0 %v191
    %297 = vmatprep.subr.mxu0 0.0
    %298 = vmatpush2.msra.mxu0 0.0
    %299 = vmatprep.subr.mxu0 0.0
    %300 = vmatpush2.msra.mxu0 0.0
    %301 = vmatprep.subr.mxu0 0.0
    %302 = vmatpush2.msra.mxu0 0.0
    %303 = vmatprep.subr.mxu0 0.0
    %304 = vmatpush2.msra.mxu0 0.0
    %305 = vmatprep.subr.mxu0 0.0
    %306 = vmatpush2.msra.mxu0 0.0
    %307 = vmatprep.subr.mxu0 0.0
    %308 = vmatpush2.msra.mxu0 0.0
    %309 = vmatprep.subr.mxu0 0.0
    %310 = vmatpush2.msra.mxu0 0.0
    %311 = vmatprep.subr.mxu0 0.0
    %312 = vmatpush2.msra.mxu0 0.0
    %313 = vmatprep.subr.mxu0 0.0
    %314 = vmatpush2.msra.mxu0 0.0
    %315 = vmatprep.subr.mxu0 0.0
    %316 = vmatpush2.msra.mxu0 0.0
    %317 = vmatprep.subr.mxu0 0.0
    %318 = vmatpush2.msra.mxu0 0.0
    %319 = vmatprep.subr.mxu0 0.0
    %320 = vmatpush2.msra.mxu0 0.0
    %321 = vmatprep.subr.mxu0 0.0
    %322 = vmatpush2.msra.mxu0 0.0
    %323 = vmatprep.subr.mxu0 0.0
    %324 = vmatpush2.msra.mxu0 0.0
    %325 = vmatprep.subr.mxu0 0.0
    %326 = vmatpush2.msra.mxu0 0.0
    %327 = vmatprep.subr.mxu0 0.0
    %328 = vmatpush2.msra.mxu0 0.0
    %329 = vmatprep.mubr.f32.mxu0 0.0
    %330 = vmatmul.mubr.f32.gmra.mxu0 %v187
    %v331 = vpop.f32.mrf.mxu0
    %v332 = vadd.f32 %v263, %v331
    %v333 = vpop.f32.mrf.mxu0
    %334 = vdwg.mxu0
    %v335 = vmax.f32 %v332, 0.0
    %v336 = vadd.f32 %v332, %v258
    %v337 = vmax.f32 %v336, 0.0
    %v338 = vsub.f32 %v337, %v335
    %v339 = vmul.f32 %v338, 0.5
    %v340 = vadd.f32 %v335, %v339
    %341 = vmatprep.subr.mxu0 0.0
    %342 = vmatpush1.msra.mxu0 %v223
    %343 = vmatprep.subr.mxu0 0.0
    %344 = vmatpush1.msra.mxu0 %v222
    %345 = vmatprep.subr.mxu0 0.0
    %346 = vmatpush1.msra.mxu0 %v221
    %347 = vmatprep.subr.mxu0 0.0
    %348 = vmatpush1.msra.mxu0 %v220
    %349 = vmatprep.subr.mxu0 0.0
    %350 = vmatpush1.msra.mxu0 %v219
    %351 = vmatprep.subr.mxu0 0.0
    %352 = vmatpush1.msra.mxu0 %v218
    %353 = vmatprep.subr.mxu0 0.0
    %354 = vmatpush1.msra.mxu0 %v217
    %355 = vmatprep.subr.mxu0 0.0
    %356 = vmatpush1.msra.mxu0 %v216
    %357 = vmatprep.subr.mxu0 0.0
    %358 = vmatpush1.msra.mxu0 %v215
    %359 = vmatprep.subr.mxu0 0.0
    %360 = vmatpush1.msra.mxu0 %v214
    %361 = vmatprep.subr.mxu0 0.0
    %362 = vmatpush1.msra.mxu0 %v213
    %363 = vmatprep.subr.mxu0 0.0
    %364 = vmatpush1.msra.mxu0 %v212
    %365 = vmatprep.subr.mxu0 0.0
    %366 = vmatpush1.msra.mxu0 %v211
    %367 = vmatprep.subr.mxu0 0.0
    %368 = vmatpush1.msra.mxu0 %v210
    %369 = vmatprep.subr.mxu0 0.0
    %370 = vmatpush1.msra.mxu0 %v209
    %371 = vmatprep.subr.mxu0 0.0
    %372 = vmatpush1.msra.mxu0 %v208
    %373 = vmatprep.subr.mxu0 0.0
    %374 = vmatpush2.msra.mxu0 0.0
    %375 = vmatprep.subr.mxu0 0.0
    %376 = vmatpush2.msra.mxu0 0.0
    %377 = vmatprep.subr.mxu0 0.0
    %378 = vmatpush2.msra.mxu0 0.0
    %379 = vmatprep.subr.mxu0 0.0
    %380 = vmatpush2.msra.mxu0 0.0
    %381 = vmatprep.subr.mxu0 0.0
    %382 = vmatpush2.msra.mxu0 0.0
    %383 = vmatprep.subr.mxu0 0.0
    %384 = vmatpush2.msra.mxu0 0.0
    %385 = vmatprep.subr.mxu0 0.0
    %386 = vmatpush2.msra.mxu0 0.0
    %387 = vmatprep.subr.mxu0 0.0
    %388 = vmatpush2.msra.mxu0 0.0
    %389 = vmatprep.subr.mxu0 0.0
    %390 = vmatpush2.msra.mxu0 0.0
    %391 = vmatprep.subr.mxu0 0.0
    %392 = vmatpush2.msra.mxu0 0.0
    %393 = vmatprep.subr.mxu0 0.0
    %394 = vmatpush2.msra.mxu0 0.0
    %395 = vmatprep.subr.mxu0 0.0
    %396 = vmatpush2.msra.mxu0 0.0
    %397 = vmatprep.subr.mxu0 0.0
    %398 = vmatpush2.msra.mxu0 0.0
    %399 = vmatprep.subr.mxu0 0.0
    %400 = vmatpush2.msra.mxu0 0.0
    %401 = vmatprep.subr.mxu0 0.0
    %402 = vmatpush2.msra.mxu0 0.0
    %403 = vmatprep.subr.mxu0 0.0
    %404 = vmatpush2.msra.mxu0 0.0
    %405 = vmatprep.mubr.f32.mxu0 0.0
    %406 = vmatmul.mubr.f32.gmra.mxu0 %v340
    %v407 = vpop.f32.mrf.mxu0
    %v408 = vadd.f32 0.0, %v407
    %v409 = vpop.f32.mrf.mxu0
    %410 = vdwg.mxu0
    %v411 = vadd.f32 %v187, %v408
    %v413 = vlaneseq
    %v414 = vshrl.u32 %v413, 7
    %v415 = vsub.s32 0, %v414
    %v416 = vrot.slane %v224, %v415
    %v418 = vadd.f32 %v411, %v416
    %419 = vmatprep.subr.mxu0 0.0
    %420 = vmatpush1.msra.mxu0 %v206
    %421 = vmatprep.subr.mxu0 0.0
    %422 = vmatpush1.msra.mxu0 %v205
    %423 = vmatprep.subr.mxu0 0.0
    %424 = vmatpush1.msra.mxu0 %v204
    %425 = vmatprep.subr.mxu0 0.0
    %426 = vmatpush1.msra.mxu0 %v203
    %427 = vmatprep.subr.mxu0 0.0
    %428 = vmatpush1.msra.mxu0 %v202
    %429 = vmatprep.subr.mxu0 0.0
    %430 = vmatpush1.msra.mxu0 %v201
    %431 = vmatprep.subr.mxu0 0.0
    %432 = vmatpush1.msra.mxu0 %v200
    %433 = vmatprep.subr.mxu0 0.0
    %434 = vmatpush1.msra.mxu0 %v199
    %435 = vmatprep.subr.mxu0 0.0
    %436 = vmatpush1.msra.mxu0 %v198
    %437 = vmatprep.subr.mxu0 0.0
    %438 = vmatpush1.msra.mxu0 %v197
    %439 = vmatprep.subr.mxu0 0.0
    %440 = vmatpush1.msra.mxu0 %v196
    %441 = vmatprep.subr.mxu0 0.0
    %442 = vmatpush1.msra.mxu0 %v195
    %443 = vmatprep.subr.mxu0 0.0
    %444 = vmatpush1.msra.mxu0 %v194
    %445 = vmatprep.subr.mxu0 0.0
    %446 = vmatpush1.msra.mxu0 %v193
    %447 = vmatprep.subr.mxu0 0.0
    %448 = vmatpush1.msra.mxu0 %v192
    %449 = vmatprep.subr.mxu0 0.0
    %450 = vmatpush1.msra.mxu0 %v191
    %451 = vmatprep.subr.mxu0 0.0
    %452 = vmatpush2.msra.mxu0 0.0
    %453 = vmatprep.subr.mxu0 0.0
    %454 = vmatpush2.msra.mxu0 0.0
    %455 = vmatprep.subr.mxu0 0.0
    %456 = vmatpush2.msra.mxu0 0.0
    %457 = vmatprep.subr.mxu0 0.0
    %458 = vmatpush2.msra.mxu0 0.0
    %459 = vmatprep.subr.mxu0 0.0
    %460 = vmatpush2.msra.mxu0 0.0
    %461 = vmatprep.subr.mxu0 0.0
    %462 = vmatpush2.msra.mxu0 0.0
    %463 = vmatprep.subr.mxu0 0.0
    %464 = vmatpush2.msra.mxu0 0.0
    %465 = vmatprep.subr.mxu0 0.0
    %466 = vmatpush2.msra.mxu0 0.0
    %467 = vmatprep.subr.mxu0 0.0
    %468 = vmatpush2.msra.mxu0 0.0
    %469 = vmatprep.subr.mxu0 0.0
    %470 = vmatpush2.msra.mxu0 0.0
    %471 = vmatprep.subr.mxu0 0.0
    %472 = vmatpush2.msra.mxu0 0.0
    %473 = vmatprep.subr.mxu0 0.0
    %474 = vmatpush2.msra.mxu0 0.0
    %475 = vmatprep.subr.mxu0 0.0
    %476 = vmatpush2.msra.mxu0 0.0
    %477 = vmatprep.subr.mxu0 0.0
    %478 = vmatpush2.msra.mxu0 0.0
    %479 = vmatprep.subr.mxu0 0.0
    %480 = vmatpush2.msra.mxu0 0.0
    %481 = vmatprep.subr.mxu0 0.0
    %482 = vmatpush2.msra.mxu0 0.0
    %483 = vmatprep.mubr.f32.mxu0 0.0
    %484 = vmatmul.mubr.f32.gmra.mxu0 %v418
    %v485 = vpop.f32.mrf.mxu0
    %v486 = vadd.f32 %v263, %v485
    %v487 = vpop.f32.mrf.mxu0
    %488 = vdwg.mxu0
    %v489 = vmax.f32 %v486, 0.0
    %v490 = vadd.f32 %v486, %v258
    %v491 = vmax.f32 %v490, 0.0
    %v492 = vsub.f32 %v491, %v489
    %v493 = vmul.f32 %v492, 0.5
    %v494 = vadd.f32 %v489, %v493
    %495 = vmatprep.subr.mxu0 0.0
    %496 = vmatpush1.msra.mxu0 %v223
    %497 = vmatprep.subr.mxu0 0.0
    %498 = vmatpush1.msra.mxu0 %v222
    %499 = vmatprep.subr.mxu0 0.0
    %500 = vmatpush1.msra.mxu0 %v221
    %501 = vmatprep.subr.mxu0 0.0
    %502 = vmatpush1.msra.mxu0 %v220
    %503 = vmatprep.subr.mxu0 0.0
    %504 = vmatpush1.msra.mxu0 %v219
    %505 = vmatprep.subr.mxu0 0.0
    %506 = vmatpush1.msra.mxu0 %v218
    %507 = vmatprep.subr.mxu0 0.0
    %508 = vmatpush1.msra.mxu0 %v217
    %509 = vmatprep.subr.mxu0 0.0
    %510 = vmatpush1.msra.mxu0 %v216
    %511 = vmatprep.subr.mxu0 0.0
    %512 = vmatpush1.msra.mxu0 %v215
    %513 = vmatprep.subr.mxu0 0.0
    %514 = vmatpush1.msra.mxu0 %v214
    %515 = vmatprep.subr.mxu0 0.0
    %516 = vmatpush1.msra.mxu0 %v213
    %517 = vmatprep.subr.mxu0 0.0
    %518 = vmatpush1.msra.mxu0 %v212
    %519 = vmatprep.subr.mxu0 0.0
    %520 = vmatpush1.msra.mxu0 %v211
    %521 = vmatprep.subr.mxu0 0.0
    %522 = vmatpush1.msra.mxu0 %v210
    %523 = vmatprep.subr.mxu0 0.0
    %524 = vmatpush1.msra.mxu0 %v209
    %525 = vmatprep.subr.mxu0 0.0
    %526 = vmatpush1.msra.mxu0 %v208
    %527 = vmatprep.subr.mxu0 0.0
    %528 = vmatpush2.msra.mxu0 0.0
    %529 = vmatprep.subr.mxu0 0.0
    %530 = vmatpush2.msra.mxu0 0.0
    %531 = vmatprep.subr.mxu0 0.0
    %532 = vmatpush2.msra.mxu0 0.0
    %533 = vmatprep.subr.mxu0 0.0
    %534 = vmatpush2.msra.mxu0 0.0
    %535 = vmatprep.subr.mxu0 0.0
    %536 = vmatpush2.msra.mxu0 0.0
    %537 = vmatprep.subr.mxu0 0.0
    %538 = vmatpush2.msra.mxu0 0.0
    %539 = vmatprep.subr.mxu0 0.0
    %540 = vmatpush2.msra.mxu0 0.0
    %541 = vmatprep.subr.mxu0 0.0
    %542 = vmatpush2.msra.mxu0 0.0
    %543 = vmatprep.subr.mxu0 0.0
    %544 = vmatpush2.msra.mxu0 0.0
    %545 = vmatprep.subr.mxu0 0.0
    %546 = vmatpush2.msra.mxu0 0.0
    %547 = vmatprep.subr.mxu0 0.0
    %548 = vmatpush2.msra.mxu0 0.0
    %549 = vmatprep.subr.mxu0 0.0
    %550 = vmatpush2.msra.mxu0 0.0
    %551 = vmatprep.subr.mxu0 0.0
    %552 = vmatpush2.msra.mxu0 0.0
    %553 = vmatprep.subr.mxu0 0.0
    %554 = vmatpush2.msra.mxu0 0.0
    %555 = vmatprep.subr.mxu0 0.0
    %556 = vmatpush2.msra.mxu0 0.0
    %557 = vmatprep.subr.mxu0 0.0
    %558 = vmatpush2.msra.mxu0 0.0
    %559 = vmatprep.mubr.f32.mxu0 0.0
    %560 = vmatmul.mubr.f32.gmra.mxu0 %v494
    %v561 = vpop.f32.mrf.mxu0
    %v562 = vadd.f32 0.0, %v561
    %v563 = vpop.f32.mrf.mxu0
    %564 = vdwg.mxu0
    %v565 = vadd.f32 %v418, %v562
    %v566 = vadd.f32 %v565, %v416
    %567 = vmatprep.subr.mxu0 0.0
    %568 = vmatpush1.msra.mxu0 %v206
    %569 = vmatprep.subr.mxu0 0.0
    %570 = vmatpush1.msra.mxu0 %v205
    %571 = vmatprep.subr.mxu0 0.0
    %572 = vmatpush1.msra.mxu0 %v204
    %573 = vmatprep.subr.mxu0 0.0
    %574 = vmatpush1.msra.mxu0 %v203
    %575 = vmatprep.subr.mxu0 0.0
    %576 = vmatpush1.msra.mxu0 %v202
    %577 = vmatprep.subr.mxu0 0.0
    %578 = vmatpush1.msra.mxu0 %v201
    %579 = vmatprep.subr.mxu0 0.0
    %580 = vmatpush1.msra.mxu0 %v200
    %581 = vmatprep.subr.mxu0 0.0
    %582 = vmatpush1.msra.mxu0 %v199
    %583 = vmatprep.subr.mxu0 0.0
    %584 = vmatpush1.msra.mxu0 %v198
    %585 = vmatprep.subr.mxu0 0.0
    %586 = vmatpush1.msra.mxu0 %v197
    %587 = vmatprep.subr.mxu0 0.0
    %588 = vmatpush1.msra.mxu0 %v196
    %589 = vmatprep.subr.mxu0 0.0
    %590 = vmatpush1.msra.mxu0 %v195
    %591 = vmatprep.subr.mxu0 0.0
    %592 = vmatpush1.msra.mxu0 %v194
    %593 = vmatprep.subr.mxu0 0.0
    %594 = vmatpush1.msra.mxu0 %v193
    %595 = vmatprep.subr.mxu0 0.0
    %596 = vmatpush1.msra.mxu0 %v192
    %597 = vmatprep.subr.mxu0 0.0
    %598 = vmatpush1.msra.mxu0 %v191
    %599 = vmatprep.subr.mxu0 0.0
    %600 = vmatpush2.msra.mxu0 0.0
    %601 = vmatprep.subr.mxu0 0.0
    %602 = vmatpush2.msra.mxu0 0.0
    %603 = vmatprep.subr.mxu0 0.0
    %604 = vmatpush2.msra.mxu0 0.0
    %605 = vmatprep.subr.mxu0 0.0
    %606 = vmatpush2.msra.mxu0 0.0
    %607 = vmatprep.subr.mxu0 0.0
    %608 = vmatpush2.msra.mxu0 0.0
    %609 = vmatprep.subr.mxu0 0.0
    %610 = vmatpush2.msra.mxu0 0.0
    %611 = vmatprep.subr.mxu0 0.0
    %612 = vmatpush2.msra.mxu0 0.0
    %613 = vmatprep.subr.mxu0 0.0
    %614 = vmatpush2.msra.mxu0 0.0
    %615 = vmatprep.subr.mxu0 0.0
    %616 = vmatpush2.msra.mxu0 0.0
    %617 = vmatprep.subr.mxu0 0.0
    %618 = vmatpush2.msra.mxu0 0.0
    %619 = vmatprep.subr.mxu0 0.0
    %620 = vmatpush2.msra.mxu0 0.0
    %621 = vmatprep.subr.mxu0 0.0
    %622 = vmatpush2.msra.mxu0 0.0
    %623 = vmatprep.subr.mxu0 0.0
    %624 = vmatpush2.msra.mxu0 0.0
    %625 = vmatprep.subr.mxu0 0.0
    %626 = vmatpush2.msra.mxu0 0.0
    %627 = vmatprep.subr.mxu0 0.0
    %628 = vmatpush2.msra.mxu0 0.0
    %629 = vmatprep.subr.mxu0 0.0
    %630 = vmatpush2.msra.mxu0 0.0
    %631 = vmatprep.mubr.f32.mxu0 0.0
    %632 = vmatmul.mubr.f32.gmra.mxu0 %v566
    %v633 = vpop.f32.mrf.mxu0
    %v634 = vadd.f32 %v263, %v633
    %v635 = vpop.f32.mrf.mxu0
    %636 = vdwg.mxu0
    %v637 = vmax.f32 %v634, 0.0
    %v638 = vadd.f32 %v634, %v258
    %v639 = vmax.f32 %v638, 0.0
    %v640 = vsub.f32 %v639, %v637
    %v641 = vmul.f32 %v640, 0.5
    %v642 = vadd.f32 %v637, %v641
    %643 = vmatprep.subr.mxu0 0.0
    %644 = vmatpush1.msra.mxu0 %v223
    %645 = vmatprep.subr.mxu0 0.0
    %646 = vmatpush1.msra.mxu0 %v222
    %647 = vmatprep.subr.mxu0 0.0
    %648 = vmatpush1.msra.mxu0 %v221
    %649 = vmatprep.subr.mxu0 0.0
    %650 = vmatpush1.msra.mxu0 %v220
    %651 = vmatprep.subr.mxu0 0.0
    %652 = vmatpush1.msra.mxu0 %v219
    %653 = vmatprep.subr.mxu0 0.0
    %654 = vmatpush1.msra.mxu0 %v218
    %655 = vmatprep.subr.mxu0 0.0
    %656 = vmatpush1.msra.mxu0 %v217
    %657 = vmatprep.subr.mxu0 0.0
    %658 = vmatpush1.msra.mxu0 %v216
    %659 = vmatprep.subr.mxu0 0.0
    %660 = vmatpush1.msra.mxu0 %v215
    %661 = vmatprep.subr.mxu0 0.0
    %662 = vmatpush1.msra.mxu0 %v214
    %663 = vmatprep.subr.mxu0 0.0
    %664 = vmatpush1.msra.mxu0 %v213
    %665 = vmatprep.subr.mxu0 0.0
    %666 = vmatpush1.msra.mxu0 %v212
    %667 = vmatprep.subr.mxu0 0.0
    %668 = vmatpush1.msra.mxu0 %v211
    %669 = vmatprep.subr.mxu0 0.0
    %670 = vmatpush1.msra.mxu0 %v210
    %671 = vmatprep.subr.mxu0 0.0
    %672 = vmatpush1.msra.mxu0 %v209
    %673 = vmatprep.subr.mxu0 0.0
    %674 = vmatpush1.msra.mxu0 %v208
    %675 = vmatprep.subr.mxu0 0.0
    %676 = vmatpush2.msra.mxu0 0.0
    %677 = vmatprep.subr.mxu0 0.0
    %678 = vmatpush2.msra.mxu0 0.0
    %679 = vmatprep.subr.mxu0 0.0
    %680 = vmatpush2.msra.mxu0 0.0
    %681 = vmatprep.subr.mxu0 0.0
    %682 = vmatpush2.msra.mxu0 0.0
    %683 = vmatprep.subr.mxu0 0.0
    %684 = vmatpush2.msra.mxu0 0.0
    %685 = vmatprep.subr.mxu0 0.0
    %686 = vmatpush2.msra.mxu0 0.0
    %687 = vmatprep.subr.mxu0 0.0
    %688 = vmatpush2.msra.mxu0 0.0
    %689 = vmatprep.subr.mxu0 0.0
    %690 = vmatpush2.msra.mxu0 0.0
    %691 = vmatprep.subr.mxu0 0.0
    %692 = vmatpush2.msra.mxu0 0.0
    %693 = vmatprep.subr.mxu0 0.0
    %694 = vmatpush2.msra.mxu0 0.0
    %695 = vmatprep.subr.mxu0 0.0
    %696 = vmatpush2.msra.mxu0 0.0
    %697 = vmatprep.subr.mxu0 0.0
    %698 = vmatpush2.msra.mxu0 0.0
    %699 = vmatprep.subr.mxu0 0.0
    %700 = vmatpush2.msra.mxu0 0.0
    %701 = vmatprep.subr.mxu0 0.0
    %702 = vmatpush2.msra.mxu0 0.0
    %703 = vmatprep.subr.mxu0 0.0
    %704 = vmatpush2.msra.mxu0 0.0
    %705 = vmatprep.subr.mxu0 0.0
    %706 = vmatpush2.msra.mxu0 0.0
    %707 = vmatprep.mubr.f32.mxu0 0.0
    %708 = vmatmul.mubr.f32.gmra.mxu0 %v642
    %v709 = vpop.f32.mrf.mxu0
    %v710 = vadd.f32 0.0, %v709
    %v711 = vpop.f32.mrf.mxu0
    %712 = vdwg.mxu0
    %v713 = vadd.f32 %v566, %v710
    %v714 = vadd.f32 %v713, %v416
    %715 = vmatprep.subr.mxu0 0.0
    %716 = vmatpush1.msra.mxu0 %v206
    %717 = vmatprep.subr.mxu0 0.0
    %718 = vmatpush1.msra.mxu0 %v205
    %719 = vmatprep.subr.mxu0 0.0
    %720 = vmatpush1.msra.mxu0 %v204
    %721 = vmatprep.subr.mxu0 0.0
    %722 = vmatpush1.msra.mxu0 %v203
    %723 = vmatprep.subr.mxu0 0.0
    %724 = vmatpush1.msra.mxu0 %v202
    %725 = vmatprep.subr.mxu0 0.0
    %726 = vmatpush1.msra.mxu0 %v201
    %727 = vmatprep.subr.mxu0 0.0
    %728 = vmatpush1.msra.mxu0 %v200
    %729 = vmatprep.subr.mxu0 0.0
    %730 = vmatpush1.msra.mxu0 %v199
    %731 = vmatprep.subr.mxu0 0.0
    %732 = vmatpush1.msra.mxu0 %v198
    %733 = vmatprep.subr.mxu0 0.0
    %734 = vmatpush1.msra.mxu0 %v197
    %735 = vmatprep.subr.mxu0 0.0
    %736 = vmatpush1.msra.mxu0 %v196
    %737 = vmatprep.subr.mxu0 0.0
    %738 = vmatpush1.msra.mxu0 %v195
    %739 = vmatprep.subr.mxu0 0.0
    %740 = vmatpush1.msra.mxu0 %v194
    %741 = vmatprep.subr.mxu0 0.0
    %742 = vmatpush1.msra.mxu0 %v193
    %743 = vmatprep.subr.mxu0 0.0
    %744 = vmatpush1.msra.mxu0 %v192
    %745 = vmatprep.subr.mxu0 0.0
    %746 = vmatpush1.msra.mxu0 %v191
    %747 = vmatprep.subr.mxu0 0.0
    %748 = vmatpush2.msra.mxu0 0.0
    %749 = vmatprep.subr.mxu0 0.0
    %750 = vmatpush2.msra.mxu0 0.0
    %751 = vmatprep.subr.mxu0 0.0
    %752 = vmatpush2.msra.mxu0 0.0
    %753 = vmatprep.subr.mxu0 0.0
    %754 = vmatpush2.msra.mxu0 0.0
    %755 = vmatprep.subr.mxu0 0.0
    %756 = vmatpush2.msra.mxu0 0.0
    %757 = vmatprep.subr.mxu0 0.0
    %758 = vmatpush2.msra.mxu0 0.0
    %759 = vmatprep.subr.mxu0 0.0
    %760 = vmatpush2.msra.mxu0 0.0
    %761 = vmatprep.subr.mxu0 0.0
    %762 = vmatpush2.msra.mxu0 0.0
    %763 = vmatprep.subr.mxu0 0.0
    %764 = vmatpush2.msra.mxu0 0.0
    %765 = vmatprep.subr.mxu0 0.0
    %766 = vmatpush2.msra.mxu0 0.0
    %767 = vmatprep.subr.mxu0 0.0
    %768 = vmatpush2.msra.mxu0 0.0
    %769 = vmatprep.subr.mxu0 0.0
    %770 = vmatpush2.msra.mxu0 0.0
    %771 = vmatprep.subr.mxu0 0.0
    %772 = vmatpush2.msra.mxu0 0.0
    %773 = vmatprep.subr.mxu0 0.0
    %774 = vmatpush2.msra.mxu0 0.0
    %775 = vmatprep.subr.mxu0 0.0
    %776 = vmatpush2.msra.mxu0 0.0
    %777 = vmatprep.subr.mxu0 0.0
    %778 = vmatpush2.msra.mxu0 0.0
    %779 = vmatprep.mubr.f32.mxu0 0.0
    %780 = vmatmul.mubr.f32.gmra.mxu0 %v714
    %v781 = vpop.f32.mrf.mxu0
    %v782 = vadd.f32 %v263, %v781
    %v783 = vpop.f32.mrf.mxu0
    %784 = vdwg.mxu0
    %v785 = vmax.f32 %v782, 0.0
    %v786 = vadd.f32 %v782, %v258
    %v787 = vmax.f32 %v786, 0.0
    %v788 = vsub.f32 %v787, %v785
    %v789 = vmul.f32 %v788, 0.5
    %v790 = vadd.f32 %v785, %v789
    %791 = vmatprep.subr.mxu0 0.0
    %792 = vmatpush1.msra.mxu0 %v223
    %793 = vmatprep.subr.mxu0 0.0
    %794 = vmatpush1.msra.mxu0 %v222
    %795 = vmatprep.subr.mxu0 0.0
    %796 = vmatpush1.msra.mxu0 %v221
    %797 = vmatprep.subr.mxu0 0.0
    %798 = vmatpush1.msra.mxu0 %v220
    %799 = vmatprep.subr.mxu0 0.0
    %800 = vmatpush1.msra.mxu0 %v219
    %801 = vmatprep.subr.mxu0 0.0
    %802 = vmatpush1.msra.mxu0 %v218
    %803 = vmatprep.subr.mxu0 0.0
    %804 = vmatpush1.msra.mxu0 %v217
    %805 = vmatprep.subr.mxu0 0.0
    %806 = vmatpush1.msra.mxu0 %v216
    %807 = vmatprep.subr.mxu0 0.0
    %808 = vmatpush1.msra.mxu0 %v215
    %809 = vmatprep.subr.mxu0 0.0
    %810 = vmatpush1.msra.mxu0 %v214
    %811 = vmatprep.subr.mxu0 0.0
    %812 = vmatpush1.msra.mxu0 %v213
    %813 = vmatprep.subr.mxu0 0.0
    %814 = vmatpush1.msra.mxu0 %v212
    %815 = vmatprep.subr.mxu0 0.0
    %816 = vmatpush1.msra.mxu0 %v211
    %817 = vmatprep.subr.mxu0 0.0
    %818 = vmatpush1.msra.mxu0 %v210
    %819 = vmatprep.subr.mxu0 0.0
    %820 = vmatpush1.msra.mxu0 %v209
    %821 = vmatprep.subr.mxu0 0.0
    %822 = vmatpush1.msra.mxu0 %v208
    %823 = vmatprep.subr.mxu0 0.0
    %824 = vmatpush2.msra.mxu0 0.0
    %825 = vmatprep.subr.mxu0 0.0
    %826 = vmatpush2.msra.mxu0 0.0
    %827 = vmatprep.subr.mxu0 0.0
    %828 = vmatpush2.msra.mxu0 0.0
    %829 = vmatprep.subr.mxu0 0.0
    %830 = vmatpush2.msra.mxu0 0.0
    %831 = vmatprep.subr.mxu0 0.0
    %832 = vmatpush2.msra.mxu0 0.0
    %833 = vmatprep.subr.mxu0 0.0
    %834 = vmatpush2.msra.mxu0 0.0
    %835 = vmatprep.subr.mxu0 0.0
    %836 = vmatpush2.msra.mxu0 0.0
    %837 = vmatprep.subr.mxu0 0.0
    %838 = vmatpush2.msra.mxu0 0.0
    %839 = vmatprep.subr.mxu0 0.0
    %840 = vmatpush2.msra.mxu0 0.0
    %841 = vmatprep.subr.mxu0 0.0
    %842 = vmatpush2.msra.mxu0 0.0
    %843 = vmatprep.subr.mxu0 0.0
    %844 = vmatpush2.msra.mxu0 0.0
    %845 = vmatprep.subr.mxu0 0.0
    %846 = vmatpush2.msra.mxu0 0.0
    %847 = vmatprep.subr.mxu0 0.0
    %848 = vmatpush2.msra.mxu0 0.0
    %849 = vmatprep.subr.mxu0 0.0
    %850 = vmatpush2.msra.mxu0 0.0
    %851 = vmatprep.subr.mxu0 0.0
    %852 = vmatpush2.msra.mxu0 0.0
    %853 = vmatprep.subr.mxu0 0.0
    %854 = vmatpush2.msra.mxu0 0.0
    %855 = vmatprep.mubr.f32.mxu0 0.0
    %856 = vmatmul.mubr.f32.gmra.mxu0 %v790
    %v857 = vpop.f32.mrf.mxu0
    %v858 = vadd.f32 0.0, %v857
    %v859 = vpop.f32.mrf.mxu0
    %860 = vdwg.mxu0
    %v861 = vadd.f32 %v714, %v858
    %v862 = vadd.f32 %v861, %v416
    %863 = vst [vmem:[%s11] sm:$0xff] %v862
    %v865 = vlaneseq
    %v866 = vshrl.u32 %v865, 7
    %v867 = vsub.s32 0, %v866
    %v868 = vrot.slane %v257, %v867
    %v869 = vlaneseq
    %v870 = vshrl.u32 %v869, 7
    %v871 = vsub.s32 1, %v870
    %v872 = vrot.slane %v257, %v871
    %875 = vmatprep.subr.mxu0 %v256
    %876 = vmatpush1.msra.mxu0 %v255
    %877 = vmatprep.subr.mxu0 %v254
    %878 = vmatpush1.msra.mxu0 %v253
    %879 = vmatprep.subr.mxu0 %v252
    %880 = vmatpush1.msra.mxu0 %v251
    %881 = vmatprep.subr.mxu0 %v250
    %882 = vmatpush1.msra.mxu0 %v249
    %883 = vmatprep.subr.mxu0 %v248
    %884 = vmatpush1.msra.mxu0 %v247
    %885 = vmatprep.subr.mxu0 %v246
    %886 = vmatpush1.msra.mxu0 %v245
    %887 = vmatprep.subr.mxu0 %v244
    %888 = vmatpush1.msra.mxu0 %v243
    %889 = vmatprep.subr.mxu0 %v242
    %890 = vmatpush1.msra.mxu0 %v241
    %891 = vmatprep.subr.mxu0 %v240
    %892 = vmatpush1.msra.mxu0 %v239
    %893 = vmatprep.subr.mxu0 %v238
    %894 = vmatpush1.msra.mxu0 %v237
    %895 = vmatprep.subr.mxu0 %v236
    %896 = vmatpush1.msra.mxu0 %v235
    %897 = vmatprep.subr.mxu0 %v234
    %898 = vmatpush1.msra.mxu0 %v233
    %899 = vmatprep.subr.mxu0 %v232
    %900 = vmatpush1.msra.mxu0 %v231
    %901 = vmatprep.subr.mxu0 %v230
    %902 = vmatpush1.msra.mxu0 %v229
    %903 = vmatprep.subr.mxu0 %v228
    %904 = vmatpush1.msra.mxu0 %v227
    %905 = vmatprep.subr.mxu0 %v226
    %906 = vmatpush1.msra.mxu0 %v225
    %907 = vmatprep.subr.mxu0 0.0
    %908 = vmatpush2.msra.mxu0 0.0
    %909 = vmatprep.subr.mxu0 0.0
    %910 = vmatpush2.msra.mxu0 0.0
    %911 = vmatprep.subr.mxu0 0.0
    %912 = vmatpush2.msra.mxu0 0.0
    %913 = vmatprep.subr.mxu0 0.0
    %914 = vmatpush2.msra.mxu0 0.0
    %915 = vmatprep.subr.mxu0 0.0
    %916 = vmatpush2.msra.mxu0 0.0
    %917 = vmatprep.subr.mxu0 0.0
    %918 = vmatpush2.msra.mxu0 0.0
    %919 = vmatprep.subr.mxu0 0.0
    %920 = vmatpush2.msra.mxu0 0.0
    %921 = vmatprep.subr.mxu0 0.0
    %922 = vmatpush2.msra.mxu0 0.0
    %923 = vmatprep.subr.mxu0 0.0
    %924 = vmatpush2.msra.mxu0 0.0
    %925 = vmatprep.subr.mxu0 0.0
    %926 = vmatpush2.msra.mxu0 0.0
    %927 = vmatprep.subr.mxu0 0.0
    %928 = vmatpush2.msra.mxu0 0.0
    %929 = vmatprep.subr.mxu0 0.0
    %930 = vmatpush2.msra.mxu0 0.0
    %931 = vmatprep.subr.mxu0 0.0
    %932 = vmatpush2.msra.mxu0 0.0
    %933 = vmatprep.subr.mxu0 0.0
    %934 = vmatpush2.msra.mxu0 0.0
    %935 = vmatprep.subr.mxu0 0.0
    %936 = vmatpush2.msra.mxu0 0.0
    %937 = vmatprep.subr.mxu0 0.0
    %938 = vmatpush2.msra.mxu0 0.0
    %939 = vmatprep.mubr.f32.mxu0 0.0
    %940 = vmatmul.mubr.f32.gmra.mxu0 %v862
    %v941 = vpop.f32.mrf.mxu0
    %v942 = vadd.f32 %v868, %v941
    %v943 = vpop.f32.mrf.mxu0
    %v944 = vadd.f32 %v872, %v943
    %945 = vdwg.mxu0
    %946 = vst [vmem:[%s12] sm:$0xff] %v942
    %947 = vst [vmem:[%s12 + $0x8] sm:$0xff] %v944
    %s948 = scalar_lea.vmem %s1, 8
    %v949 = vld [vmem:[%s948] sm:$0xff]
    %v950 = vadd.f32 %v332, %v949
    %v951 = vmax.f32 %v950, 0.0
    %v952 = vsub.f32 %v951, %v335
    %v953 = vmul.f32 %v952, 0.5
    %v954 = vadd.f32 %v335, %v953
    %955 = vmatprep.subr.mxu0 0.0
    %956 = vmatpush1.msra.mxu0 %v223
    %957 = vmatprep.subr.mxu0 0.0
    %958 = vmatpush1.msra.mxu0 %v222
    %959 = vmatprep.subr.mxu0 0.0
    %960 = vmatpush1.msra.mxu0 %v221
    %961 = vmatprep.subr.mxu0 0.0
    %962 = vmatpush1.msra.mxu0 %v220
    %963 = vmatprep.subr.mxu0 0.0
    %964 = vmatpush1.msra.mxu0 %v219
    %965 = vmatprep.subr.mxu0 0.0
    %966 = vmatpush1.msra.mxu0 %v218
    %967 = vmatprep.subr.mxu0 0.0
    %968 = vmatpush1.msra.mxu0 %v217
    %969 = vmatprep.subr.mxu0 0.0
    %970 = vmatpush1.msra.mxu0 %v216
    %971 = vmatprep.subr.mxu0 0.0
    %972 = vmatpush1.msra.mxu0 %v215
    %973 = vmatprep.subr.mxu0 0.0
    %974 = vmatpush1.msra.mxu0 %v214
    %975 = vmatprep.subr.mxu0 0.0
    %976 = vmatpush1.msra.mxu0 %v213
    %977 = vmatprep.subr.mxu0 0.0
    %978 = vmatpush1.msra.mxu0 %v212
    %979 = vmatprep.subr.mxu0 0.0
    %980 = vmatpush1.msra.mxu0 %v211
    %981 = vmatprep.subr.mxu0 0.0
    %982 = vmatpush1.msra.mxu0 %v210
    %983 = vmatprep.subr.mxu0 0.0
    %984 = vmatpush1.msra.mxu0 %v209
    %985 = vmatprep.subr.mxu0 0.0
    %986 = vmatpush1.msra.mxu0 %v208
    %987 = vmatprep.subr.mxu0 0.0
    %988 = vmatpush2.msra.mxu0 0.0
    %989 = vmatprep.subr.mxu0 0.0
    %990 = vmatpush2.msra.mxu0 0.0
    %991 = vmatprep.subr.mxu0 0.0
    %992 = vmatpush2.msra.mxu0 0.0
    %993 = vmatprep.subr.mxu0 0.0
    %994 = vmatpush2.msra.mxu0 0.0
    %995 = vmatprep.subr.mxu0 0.0
    %996 = vmatpush2.msra.mxu0 0.0
    %997 = vmatprep.subr.mxu0 0.0
    %998 = vmatpush2.msra.mxu0 0.0
    %999 = vmatprep.subr.mxu0 0.0
    %1000 = vmatpush2.msra.mxu0 0.0
    %1001 = vmatprep.subr.mxu0 0.0
    %1002 = vmatpush2.msra.mxu0 0.0
    %1003 = vmatprep.subr.mxu0 0.0
    %1004 = vmatpush2.msra.mxu0 0.0
    %1005 = vmatprep.subr.mxu0 0.0
    %1006 = vmatpush2.msra.mxu0 0.0
    %1007 = vmatprep.subr.mxu0 0.0
    %1008 = vmatpush2.msra.mxu0 0.0
    %1009 = vmatprep.subr.mxu0 0.0
    %1010 = vmatpush2.msra.mxu0 0.0
    %1011 = vmatprep.subr.mxu0 0.0
    %1012 = vmatpush2.msra.mxu0 0.0
    %1013 = vmatprep.subr.mxu0 0.0
    %1014 = vmatpush2.msra.mxu0 0.0
    %1015 = vmatprep.subr.mxu0 0.0
    %1016 = vmatpush2.msra.mxu0 0.0
    %1017 = vmatprep.subr.mxu0 0.0
    %1018 = vmatpush2.msra.mxu0 0.0
    %1019 = vmatprep.mubr.f32.mxu0 0.0
    %1020 = vmatmul.mubr.f32.gmra.mxu0 %v954
    %v1021 = vpop.f32.mrf.mxu0
    %v1022 = vadd.f32 0.0, %v1021
    %v1023 = vpop.f32.mrf.mxu0
    %1024 = vdwg.mxu0
    %v1025 = vadd.f32 %v187, %v1022
    %v1026 = vadd.f32 %v1025, %v416
    %1027 = vmatprep.subr.mxu0 0.0
    %1028 = vmatpush1.msra.mxu0 %v206
    %1029 = vmatprep.subr.mxu0 0.0
    %1030 = vmatpush1.msra.mxu0 %v205
    %1031 = vmatprep.subr.mxu0 0.0
    %1032 = vmatpush1.msra.mxu0 %v204
    %1033 = vmatprep.subr.mxu0 0.0
    %1034 = vmatpush1.msra.mxu0 %v203
    %1035 = vmatprep.subr.mxu0 0.0
    %1036 = vmatpush1.msra.mxu0 %v202
    %1037 = vmatprep.subr.mxu0 0.0
    %1038 = vmatpush1.msra.mxu0 %v201
    %1039 = vmatprep.subr.mxu0 0.0
    %1040 = vmatpush1.msra.mxu0 %v200
    %1041 = vmatprep.subr.mxu0 0.0
    %1042 = vmatpush1.msra.mxu0 %v199
    %1043 = vmatprep.subr.mxu0 0.0
    %1044 = vmatpush1.msra.mxu0 %v198
    %1045 = vmatprep.subr.mxu0 0.0
    %1046 = vmatpush1.msra.mxu0 %v197
    %1047 = vmatprep.subr.mxu0 0.0
    %1048 = vmatpush1.msra.mxu0 %v196
    %1049 = vmatprep.subr.mxu0 0.0
    %1050 = vmatpush1.msra.mxu0 %v195
    %1051 = vmatprep.subr.mxu0 0.0
    %1052 = vmatpush1.msra.mxu0 %v194
    %1053 = vmatprep.subr.mxu0 0.0
    %1054 = vmatpush1.msra.mxu0 %v193
    %1055 = vmatprep.subr.mxu0 0.0
    %1056 = vmatpush1.msra.mxu0 %v192
    %1057 = vmatprep.subr.mxu0 0.0
    %1058 = vmatpush1.msra.mxu0 %v191
    %1059 = vmatprep.subr.mxu0 0.0
    %1060 = vmatpush2.msra.mxu0 0.0
    %1061 = vmatprep.subr.mxu0 0.0
    %1062 = vmatpush2.msra.mxu0 0.0
    %1063 = vmatprep.subr.mxu0 0.0
    %1064 = vmatpush2.msra.mxu0 0.0
    %1065 = vmatprep.subr.mxu0 0.0
    %1066 = vmatpush2.msra.mxu0 0.0
    %1067 = vmatprep.subr.mxu0 0.0
    %1068 = vmatpush2.msra.mxu0 0.0
    %1069 = vmatprep.subr.mxu0 0.0
    %1070 = vmatpush2.msra.mxu0 0.0
    %1071 = vmatprep.subr.mxu0 0.0
    %1072 = vmatpush2.msra.mxu0 0.0
    %1073 = vmatprep.subr.mxu0 0.0
    %1074 = vmatpush2.msra.mxu0 0.0
    %1075 = vmatprep.subr.mxu0 0.0
    %1076 = vmatpush2.msra.mxu0 0.0
    %1077 = vmatprep.subr.mxu0 0.0
    %1078 = vmatpush2.msra.mxu0 0.0
    %1079 = vmatprep.subr.mxu0 0.0
    %1080 = vmatpush2.msra.mxu0 0.0
    %1081 = vmatprep.subr.mxu0 0.0
    %1082 = vmatpush2.msra.mxu0 0.0
    %1083 = vmatprep.subr.mxu0 0.0
    %1084 = vmatpush2.msra.mxu0 0.0
    %1085 = vmatprep.subr.mxu0 0.0
    %1086 = vmatpush2.msra.mxu0 0.0
    %1087 = vmatprep.subr.mxu0 0.0
    %1088 = vmatpush2.msra.mxu0 0.0
    %1089 = vmatprep.subr.mxu0 0.0
    %1090 = vmatpush2.msra.mxu0 0.0
    %1091 = vmatprep.mubr.f32.mxu0 0.0
    %1092 = vmatmul.mubr.f32.gmra.mxu0 %v1026
    %v1093 = vpop.f32.mrf.mxu0
    %v1094 = vadd.f32 %v263, %v1093
    %v1095 = vpop.f32.mrf.mxu0
    %1096 = vdwg.mxu0
    %v1097 = vmax.f32 %v1094, 0.0
    %v1098 = vadd.f32 %v1094, %v949
    %v1099 = vmax.f32 %v1098, 0.0
    %v1100 = vsub.f32 %v1099, %v1097
    %v1101 = vmul.f32 %v1100, 0.5
    %v1102 = vadd.f32 %v1097, %v1101
    %1103 = vmatprep.subr.mxu0 0.0
    %1104 = vmatpush1.msra.mxu0 %v223
    %1105 = vmatprep.subr.mxu0 0.0
    %1106 = vmatpush1.msra.mxu0 %v222
    %1107 = vmatprep.subr.mxu0 0.0
    %1108 = vmatpush1.msra.mxu0 %v221
    %1109 = vmatprep.subr.mxu0 0.0
    %1110 = vmatpush1.msra.mxu0 %v220
    %1111 = vmatprep.subr.mxu0 0.0
    %1112 = vmatpush1.msra.mxu0 %v219
    %1113 = vmatprep.subr.mxu0 0.0
    %1114 = vmatpush1.msra.mxu0 %v218
    %1115 = vmatprep.subr.mxu0 0.0
    %1116 = vmatpush1.msra.mxu0 %v217
    %1117 = vmatprep.subr.mxu0 0.0
    %1118 = vmatpush1.msra.mxu0 %v216
    %1119 = vmatprep.subr.mxu0 0.0
    %1120 = vmatpush1.msra.mxu0 %v215
    %1121 = vmatprep.subr.mxu0 0.0
    %1122 = vmatpush1.msra.mxu0 %v214
    %1123 = vmatprep.subr.mxu0 0.0
    %1124 = vmatpush1.msra.mxu0 %v213
    %1125 = vmatprep.subr.mxu0 0.0
    %1126 = vmatpush1.msra.mxu0 %v212
    %1127 = vmatprep.subr.mxu0 0.0
    %1128 = vmatpush1.msra.mxu0 %v211
    %1129 = vmatprep.subr.mxu0 0.0
    %1130 = vmatpush1.msra.mxu0 %v210
    %1131 = vmatprep.subr.mxu0 0.0
    %1132 = vmatpush1.msra.mxu0 %v209
    %1133 = vmatprep.subr.mxu0 0.0
    %1134 = vmatpush1.msra.mxu0 %v208
    %1135 = vmatprep.subr.mxu0 0.0
    %1136 = vmatpush2.msra.mxu0 0.0
    %1137 = vmatprep.subr.mxu0 0.0
    %1138 = vmatpush2.msra.mxu0 0.0
    %1139 = vmatprep.subr.mxu0 0.0
    %1140 = vmatpush2.msra.mxu0 0.0
    %1141 = vmatprep.subr.mxu0 0.0
    %1142 = vmatpush2.msra.mxu0 0.0
    %1143 = vmatprep.subr.mxu0 0.0
    %1144 = vmatpush2.msra.mxu0 0.0
    %1145 = vmatprep.subr.mxu0 0.0
    %1146 = vmatpush2.msra.mxu0 0.0
    %1147 = vmatprep.subr.mxu0 0.0
    %1148 = vmatpush2.msra.mxu0 0.0
    %1149 = vmatprep.subr.mxu0 0.0
    %1150 = vmatpush2.msra.mxu0 0.0
    %1151 = vmatprep.subr.mxu0 0.0
    %1152 = vmatpush2.msra.mxu0 0.0
    %1153 = vmatprep.subr.mxu0 0.0
    %1154 = vmatpush2.msra.mxu0 0.0
    %1155 = vmatprep.subr.mxu0 0.0
    %1156 = vmatpush2.msra.mxu0 0.0
    %1157 = vmatprep.subr.mxu0 0.0
    %1158 = vmatpush2.msra.mxu0 0.0
    %1159 = vmatprep.subr.mxu0 0.0
    %1160 = vmatpush2.msra.mxu0 0.0
    %1161 = vmatprep.subr.mxu0 0.0
    %1162 = vmatpush2.msra.mxu0 0.0
    %1163 = vmatprep.subr.mxu0 0.0
    %1164 = vmatpush2.msra.mxu0 0.0
    %1165 = vmatprep.subr.mxu0 0.0
    %1166 = vmatpush2.msra.mxu0 0.0
    %1167 = vmatprep.mubr.f32.mxu0 0.0
    %1168 = vmatmul.mubr.f32.gmra.mxu0 %v1102
    %v1169 = vpop.f32.mrf.mxu0
    %v1170 = vadd.f32 0.0, %v1169
    %v1171 = vpop.f32.mrf.mxu0
    %1172 = vdwg.mxu0
    %v1173 = vadd.f32 %v1026, %v1170
    %v1174 = vadd.f32 %v1173, %v416
    %1175 = vmatprep.subr.mxu0 0.0
    %1176 = vmatpush1.msra.mxu0 %v206
    %1177 = vmatprep.subr.mxu0 0.0
    %1178 = vmatpush1.msra.mxu0 %v205
    %1179 = vmatprep.subr.mxu0 0.0
    %1180 = vmatpush1.msra.mxu0 %v204
    %1181 = vmatprep.subr.mxu0 0.0
    %1182 = vmatpush1.msra.mxu0 %v203
    %1183 = vmatprep.subr.mxu0 0.0
    %1184 = vmatpush1.msra.mxu0 %v202
    %1185 = vmatprep.subr.mxu0 0.0
    %1186 = vmatpush1.msra.mxu0 %v201
    %1187 = vmatprep.subr.mxu0 0.0
    %1188 = vmatpush1.msra.mxu0 %v200
    %1189 = vmatprep.subr.mxu0 0.0
    %1190 = vmatpush1.msra.mxu0 %v199
    %1191 = vmatprep.subr.mxu0 0.0
    %1192 = vmatpush1.msra.mxu0 %v198
    %1193 = vmatprep.subr.mxu0 0.0
    %1194 = vmatpush1.msra.mxu0 %v197
    %1195 = vmatprep.subr.mxu0 0.0
    %1196 = vmatpush1.msra.mxu0 %v196
    %1197 = vmatprep.subr.mxu0 0.0
    %1198 = vmatpush1.msra.mxu0 %v195
    %1199 = vmatprep.subr.mxu0 0.0
    %1200 = vmatpush1.msra.mxu0 %v194
    %1201 = vmatprep.subr.mxu0 0.0
    %1202 = vmatpush1.msra.mxu0 %v193
    %1203 = vmatprep.subr.mxu0 0.0
    %1204 = vmatpush1.msra.mxu0 %v192
    %1205 = vmatprep.subr.mxu0 0.0
    %1206 = vmatpush1.msra.mxu0 %v191
    %1207 = vmatprep.subr.mxu0 0.0
    %1208 = vmatpush2.msra.mxu0 0.0
    %1209 = vmatprep.subr.mxu0 0.0
    %1210 = vmatpush2.msra.mxu0 0.0
    %1211 = vmatprep.subr.mxu0 0.0
    %1212 = vmatpush2.msra.mxu0 0.0
    %1213 = vmatprep.subr.mxu0 0.0
    %1214 = vmatpush2.msra.mxu0 0.0
    %1215 = vmatprep.subr.mxu0 0.0
    %1216 = vmatpush2.msra.mxu0 0.0
    %1217 = vmatprep.subr.mxu0 0.0
    %1218 = vmatpush2.msra.mxu0 0.0
    %1219 = vmatprep.subr.mxu0 0.0
    %1220 = vmatpush2.msra.mxu0 0.0
    %1221 = vmatprep.subr.mxu0 0.0
    %1222 = vmatpush2.msra.mxu0 0.0
    %1223 = vmatprep.subr.mxu0 0.0
    %1224 = vmatpush2.msra.mxu0 0.0
    %1225 = vmatprep.subr.mxu0 0.0
    %1226 = vmatpush2.msra.mxu0 0.0
    %1227 = vmatprep.subr.mxu0 0.0
    %1228 = vmatpush2.msra.mxu0 0.0
    %1229 = vmatprep.subr.mxu0 0.0
    %1230 = vmatpush2.msra.mxu0 0.0
    %1231 = vmatprep.subr.mxu0 0.0
    %1232 = vmatpush2.msra.mxu0 0.0
    %1233 = vmatprep.subr.mxu0 0.0
    %1234 = vmatpush2.msra.mxu0 0.0
    %1235 = vmatprep.subr.mxu0 0.0
    %1236 = vmatpush2.msra.mxu0 0.0
    %1237 = vmatprep.subr.mxu0 0.0
    %1238 = vmatpush2.msra.mxu0 0.0
    %1239 = vmatprep.mubr.f32.mxu0 0.0
    %1240 = vmatmul.mubr.f32.gmra.mxu0 %v1174
    %v1241 = vpop.f32.mrf.mxu0
    %v1242 = vadd.f32 %v263, %v1241
    %v1243 = vpop.f32.mrf.mxu0
    %1244 = vdwg.mxu0
    %v1245 = vmax.f32 %v1242, 0.0
    %v1246 = vadd.f32 %v1242, %v949
    %v1247 = vmax.f32 %v1246, 0.0
    %v1248 = vsub.f32 %v1247, %v1245
    %v1249 = vmul.f32 %v1248, 0.5
    %v1250 = vadd.f32 %v1245, %v1249
    %1251 = vmatprep.subr.mxu0 0.0
    %1252 = vmatpush1.msra.mxu0 %v223
    %1253 = vmatprep.subr.mxu0 0.0
    %1254 = vmatpush1.msra.mxu0 %v222
    %1255 = vmatprep.subr.mxu0 0.0
    %1256 = vmatpush1.msra.mxu0 %v221
    %1257 = vmatprep.subr.mxu0 0.0
    %1258 = vmatpush1.msra.mxu0 %v220
    %1259 = vmatprep.subr.mxu0 0.0
    %1260 = vmatpush1.msra.mxu0 %v219
    %1261 = vmatprep.subr.mxu0 0.0
    %1262 = vmatpush1.msra.mxu0 %v218
    %1263 = vmatprep.subr.mxu0 0.0
    %1264 = vmatpush1.msra.mxu0 %v217
    %1265 = vmatprep.subr.mxu0 0.0
    %1266 = vmatpush1.msra.mxu0 %v216
    %1267 = vmatprep.subr.mxu0 0.0
    %1268 = vmatpush1.msra.mxu0 %v215
    %1269 = vmatprep.subr.mxu0 0.0
    %1270 = vmatpush1.msra.mxu0 %v214
    %1271 = vmatprep.subr.mxu0 0.0
    %1272 = vmatpush1.msra.mxu0 %v213
    %1273 = vmatprep.subr.mxu0 0.0
    %1274 = vmatpush1.msra.mxu0 %v212
    %1275 = vmatprep.subr.mxu0 0.0
    %1276 = vmatpush1.msra.mxu0 %v211
    %1277 = vmatprep.subr.mxu0 0.0
    %1278 = vmatpush1.msra.mxu0 %v210
    %1279 = vmatprep.subr.mxu0 0.0
    %1280 = vmatpush1.msra.mxu0 %v209
    %1281 = vmatprep.subr.mxu0 0.0
    %1282 = vmatpush1.msra.mxu0 %v208
    %1283 = vmatprep.subr.mxu0 0.0
    %1284 = vmatpush2.msra.mxu0 0.0
    %1285 = vmatprep.subr.mxu0 0.0
    %1286 = vmatpush2.msra.mxu0 0.0
    %1287 = vmatprep.subr.mxu0 0.0
    %1288 = vmatpush2.msra.mxu0 0.0
    %1289 = vmatprep.subr.mxu0 0.0
    %1290 = vmatpush2.msra.mxu0 0.0
    %1291 = vmatprep.subr.mxu0 0.0
    %1292 = vmatpush2.msra.mxu0 0.0
    %1293 = vmatprep.subr.mxu0 0.0
    %1294 = vmatpush2.msra.mxu0 0.0
    %1295 = vmatprep.subr.mxu0 0.0
    %1296 = vmatpush2.msra.mxu0 0.0
    %1297 = vmatprep.subr.mxu0 0.0
    %1298 = vmatpush2.msra.mxu0 0.0
    %1299 = vmatprep.subr.mxu0 0.0
    %1300 = vmatpush2.msra.mxu0 0.0
    %1301 = vmatprep.subr.mxu0 0.0
    %1302 = vmatpush2.msra.mxu0 0.0
    %1303 = vmatprep.subr.mxu0 0.0
    %1304 = vmatpush2.msra.mxu0 0.0
    %1305 = vmatprep.subr.mxu0 0.0
    %1306 = vmatpush2.msra.mxu0 0.0
    %1307 = vmatprep.subr.mxu0 0.0
    %1308 = vmatpush2.msra.mxu0 0.0
    %1309 = vmatprep.subr.mxu0 0.0
    %1310 = vmatpush2.msra.mxu0 0.0
    %1311 = vmatprep.subr.mxu0 0.0
    %1312 = vmatpush2.msra.mxu0 0.0
    %1313 = vmatprep.subr.mxu0 0.0
    %1314 = vmatpush2.msra.mxu0 0.0
    %1315 = vmatprep.mubr.f32.mxu0 0.0
    %1316 = vmatmul.mubr.f32.gmra.mxu0 %v1250
    %v1317 = vpop.f32.mrf.mxu0
    %v1318 = vadd.f32 0.0, %v1317
    %v1319 = vpop.f32.mrf.mxu0
    %1320 = vdwg.mxu0
    %v1321 = vadd.f32 %v1174, %v1318
    %v1322 = vadd.f32 %v1321, %v416
    %1323 = vmatprep.subr.mxu0 0.0
    %1324 = vmatpush1.msra.mxu0 %v206
    %1325 = vmatprep.subr.mxu0 0.0
    %1326 = vmatpush1.msra.mxu0 %v205
    %1327 = vmatprep.subr.mxu0 0.0
    %1328 = vmatpush1.msra.mxu0 %v204
    %1329 = vmatprep.subr.mxu0 0.0
    %1330 = vmatpush1.msra.mxu0 %v203
    %1331 = vmatprep.subr.mxu0 0.0
    %1332 = vmatpush1.msra.mxu0 %v202
    %1333 = vmatprep.subr.mxu0 0.0
    %1334 = vmatpush1.msra.mxu0 %v201
    %1335 = vmatprep.subr.mxu0 0.0
    %1336 = vmatpush1.msra.mxu0 %v200
    %1337 = vmatprep.subr.mxu0 0.0
    %1338 = vmatpush1.msra.mxu0 %v199
    %1339 = vmatprep.subr.mxu0 0.0
    %1340 = vmatpush1.msra.mxu0 %v198
    %1341 = vmatprep.subr.mxu0 0.0
    %1342 = vmatpush1.msra.mxu0 %v197
    %1343 = vmatprep.subr.mxu0 0.0
    %1344 = vmatpush1.msra.mxu0 %v196
    %1345 = vmatprep.subr.mxu0 0.0
    %1346 = vmatpush1.msra.mxu0 %v195
    %1347 = vmatprep.subr.mxu0 0.0
    %1348 = vmatpush1.msra.mxu0 %v194
    %1349 = vmatprep.subr.mxu0 0.0
    %1350 = vmatpush1.msra.mxu0 %v193
    %1351 = vmatprep.subr.mxu0 0.0
    %1352 = vmatpush1.msra.mxu0 %v192
    %1353 = vmatprep.subr.mxu0 0.0
    %1354 = vmatpush1.msra.mxu0 %v191
    %1355 = vmatprep.subr.mxu0 0.0
    %1356 = vmatpush2.msra.mxu0 0.0
    %1357 = vmatprep.subr.mxu0 0.0
    %1358 = vmatpush2.msra.mxu0 0.0
    %1359 = vmatprep.subr.mxu0 0.0
    %1360 = vmatpush2.msra.mxu0 0.0
    %1361 = vmatprep.subr.mxu0 0.0
    %1362 = vmatpush2.msra.mxu0 0.0
    %1363 = vmatprep.subr.mxu0 0.0
    %1364 = vmatpush2.msra.mxu0 0.0
    %1365 = vmatprep.subr.mxu0 0.0
    %1366 = vmatpush2.msra.mxu0 0.0
    %1367 = vmatprep.subr.mxu0 0.0
    %1368 = vmatpush2.msra.mxu0 0.0
    %1369 = vmatprep.subr.mxu0 0.0
    %1370 = vmatpush2.msra.mxu0 0.0
    %1371 = vmatprep.subr.mxu0 0.0
    %1372 = vmatpush2.msra.mxu0 0.0
    %1373 = vmatprep.subr.mxu0 0.0
    %1374 = vmatpush2.msra.mxu0 0.0
    %1375 = vmatprep.subr.mxu0 0.0
    %1376 = vmatpush2.msra.mxu0 0.0
    %1377 = vmatprep.subr.mxu0 0.0
    %1378 = vmatpush2.msra.mxu0 0.0
    %1379 = vmatprep.subr.mxu0 0.0
    %1380 = vmatpush2.msra.mxu0 0.0
    %1381 = vmatprep.subr.mxu0 0.0
    %1382 = vmatpush2.msra.mxu0 0.0
    %1383 = vmatprep.subr.mxu0 0.0
    %1384 = vmatpush2.msra.mxu0 0.0
    %1385 = vmatprep.subr.mxu0 0.0
    %1386 = vmatpush2.msra.mxu0 0.0
    %1387 = vmatprep.mubr.f32.mxu0 0.0
    %1388 = vmatmul.mubr.f32.gmra.mxu0 %v1322
    %v1389 = vpop.f32.mrf.mxu0
    %v1390 = vadd.f32 %v263, %v1389
    %v1391 = vpop.f32.mrf.mxu0
    %1392 = vdwg.mxu0
    %v1393 = vmax.f32 %v1390, 0.0
    %v1394 = vadd.f32 %v1390, %v949
    %v1395 = vmax.f32 %v1394, 0.0
    %v1396 = vsub.f32 %v1395, %v1393
    %v1397 = vmul.f32 %v1396, 0.5
    %v1398 = vadd.f32 %v1393, %v1397
    %1399 = vmatprep.subr.mxu0 0.0
    %1400 = vmatpush1.msra.mxu0 %v223
    %1401 = vmatprep.subr.mxu0 0.0
    %1402 = vmatpush1.msra.mxu0 %v222
    %1403 = vmatprep.subr.mxu0 0.0
    %1404 = vmatpush1.msra.mxu0 %v221
    %1405 = vmatprep.subr.mxu0 0.0
    %1406 = vmatpush1.msra.mxu0 %v220
    %1407 = vmatprep.subr.mxu0 0.0
    %1408 = vmatpush1.msra.mxu0 %v219
    %1409 = vmatprep.subr.mxu0 0.0
    %1410 = vmatpush1.msra.mxu0 %v218
    %1411 = vmatprep.subr.mxu0 0.0
    %1412 = vmatpush1.msra.mxu0 %v217
    %1413 = vmatprep.subr.mxu0 0.0
    %1414 = vmatpush1.msra.mxu0 %v216
    %1415 = vmatprep.subr.mxu0 0.0
    %1416 = vmatpush1.msra.mxu0 %v215
    %1417 = vmatprep.subr.mxu0 0.0
    %1418 = vmatpush1.msra.mxu0 %v214
    %1419 = vmatprep.subr.mxu0 0.0
    %1420 = vmatpush1.msra.mxu0 %v213
    %1421 = vmatprep.subr.mxu0 0.0
    %1422 = vmatpush1.msra.mxu0 %v212
    %1423 = vmatprep.subr.mxu0 0.0
    %1424 = vmatpush1.msra.mxu0 %v211
    %1425 = vmatprep.subr.mxu0 0.0
    %1426 = vmatpush1.msra.mxu0 %v210
    %1427 = vmatprep.subr.mxu0 0.0
    %1428 = vmatpush1.msra.mxu0 %v209
    %1429 = vmatprep.subr.mxu0 0.0
    %1430 = vmatpush1.msra.mxu0 %v208
    %1431 = vmatprep.subr.mxu0 0.0
    %1432 = vmatpush2.msra.mxu0 0.0
    %1433 = vmatprep.subr.mxu0 0.0
    %1434 = vmatpush2.msra.mxu0 0.0
    %1435 = vmatprep.subr.mxu0 0.0
    %1436 = vmatpush2.msra.mxu0 0.0
    %1437 = vmatprep.subr.mxu0 0.0
    %1438 = vmatpush2.msra.mxu0 0.0
    %1439 = vmatprep.subr.mxu0 0.0
    %1440 = vmatpush2.msra.mxu0 0.0
    %1441 = vmatprep.subr.mxu0 0.0
    %1442 = vmatpush2.msra.mxu0 0.0
    %1443 = vmatprep.subr.mxu0 0.0
    %1444 = vmatpush2.msra.mxu0 0.0
    %1445 = vmatprep.subr.mxu0 0.0
    %1446 = vmatpush2.msra.mxu0 0.0
    %1447 = vmatprep.subr.mxu0 0.0
    %1448 = vmatpush2.msra.mxu0 0.0
    %1449 = vmatprep.subr.mxu0 0.0
    %1450 = vmatpush2.msra.mxu0 0.0
    %1451 = vmatprep.subr.mxu0 0.0
    %1452 = vmatpush2.msra.mxu0 0.0
    %1453 = vmatprep.subr.mxu0 0.0
    %1454 = vmatpush2.msra.mxu0 0.0
    %1455 = vmatprep.subr.mxu0 0.0
    %1456 = vmatpush2.msra.mxu0 0.0
    %1457 = vmatprep.subr.mxu0 0.0
    %1458 = vmatpush2.msra.mxu0 0.0
    %1459 = vmatprep.subr.mxu0 0.0
    %1460 = vmatpush2.msra.mxu0 0.0
    %1461 = vmatprep.subr.mxu0 0.0
    %1462 = vmatpush2.msra.mxu0 0.0
    %1463 = vmatprep.mubr.f32.mxu0 0.0
    %1464 = vmatmul.mubr.f32.gmra.mxu0 %v1398
    %v1465 = vpop.f32.mrf.mxu0
    %v1466 = vadd.f32 0.0, %v1465
    %v1467 = vpop.f32.mrf.mxu0
    %1468 = vdwg.mxu0
    %v1469 = vadd.f32 %v1322, %v1466
    %v1470 = vadd.f32 %v1469, %v416
    %s1471 = scalar_lea.vmem %s11, 8
    %1472 = vst [vmem:[%s1471] sm:$0xff] %v1470
    %1473 = vmatprep.subr.mxu0 %v256
    %1474 = vmatpush1.msra.mxu0 %v255
    %1475 = vmatprep.subr.mxu0 %v254
    %1476 = vmatpush1.msra.mxu0 %v253
    %1477 = vmatprep.subr.mxu0 %v252
    %1478 = vmatpush1.msra.mxu0 %v251
    %1479 = vmatprep.subr.mxu0 %v250
    %1480 = vmatpush1.msra.mxu0 %v249
    %1481 = vmatprep.subr.mxu0 %v248
    %1482 = vmatpush1.msra.mxu0 %v247
    %1483 = vmatprep.subr.mxu0 %v246
    %1484 = vmatpush1.msra.mxu0 %v245
    %1485 = vmatprep.subr.mxu0 %v244
    %1486 = vmatpush1.msra.mxu0 %v243
    %1487 = vmatprep.subr.mxu0 %v242
    %1488 = vmatpush1.msra.mxu0 %v241
    %1489 = vmatprep.subr.mxu0 %v240
    %1490 = vmatpush1.msra.mxu0 %v239
    %1491 = vmatprep.subr.mxu0 %v238
    %1492 = vmatpush1.msra.mxu0 %v237
    %1493 = vmatprep.subr.mxu0 %v236
    %1494 = vmatpush1.msra.mxu0 %v235
    %1495 = vmatprep.subr.mxu0 %v234
    %1496 = vmatpush1.msra.mxu0 %v233
    %1497 = vmatprep.subr.mxu0 %v232
    %1498 = vmatpush1.msra.mxu0 %v231
    %1499 = vmatprep.subr.mxu0 %v230
    %1500 = vmatpush1.msra.mxu0 %v229
    %1501 = vmatprep.subr.mxu0 %v228
    %1502 = vmatpush1.msra.mxu0 %v227
    %1503 = vmatprep.subr.mxu0 %v226
    %1504 = vmatpush1.msra.mxu0 %v225
    %1505 = vmatprep.subr.mxu0 0.0
    %1506 = vmatpush2.msra.mxu0 0.0
    %1507 = vmatprep.subr.mxu0 0.0
    %1508 = vmatpush2.msra.mxu0 0.0
    %1509 = vmatprep.subr.mxu0 0.0
    %1510 = vmatpush2.msra.mxu0 0.0
    %1511 = vmatprep.subr.mxu0 0.0
    %1512 = vmatpush2.msra.mxu0 0.0
    %1513 = vmatprep.subr.mxu0 0.0
    %1514 = vmatpush2.msra.mxu0 0.0
    %1515 = vmatprep.subr.mxu0 0.0
    %1516 = vmatpush2.msra.mxu0 0.0
    %1517 = vmatprep.subr.mxu0 0.0
    %1518 = vmatpush2.msra.mxu0 0.0
    %1519 = vmatprep.subr.mxu0 0.0
    %1520 = vmatpush2.msra.mxu0 0.0
    %1521 = vmatprep.subr.mxu0 0.0
    %1522 = vmatpush2.msra.mxu0 0.0
    %1523 = vmatprep.subr.mxu0 0.0
    %1524 = vmatpush2.msra.mxu0 0.0
    %1525 = vmatprep.subr.mxu0 0.0
    %1526 = vmatpush2.msra.mxu0 0.0
    %1527 = vmatprep.subr.mxu0 0.0
    %1528 = vmatpush2.msra.mxu0 0.0
    %1529 = vmatprep.subr.mxu0 0.0
    %1530 = vmatpush2.msra.mxu0 0.0
    %1531 = vmatprep.subr.mxu0 0.0
    %1532 = vmatpush2.msra.mxu0 0.0
    %1533 = vmatprep.subr.mxu0 0.0
    %1534 = vmatpush2.msra.mxu0 0.0
    %1535 = vmatprep.subr.mxu0 0.0
    %1536 = vmatpush2.msra.mxu0 0.0
    %1537 = vmatprep.mubr.f32.mxu0 0.0
    %1538 = vmatmul.mubr.f32.gmra.mxu0 %v1470
    %v1539 = vpop.f32.mrf.mxu0
    %v1540 = vadd.f32 %v868, %v1539
    %v1541 = vpop.f32.mrf.mxu0
    %v1542 = vadd.f32 %v872, %v1541
    %1543 = vdwg.mxu0
    %s1544 = scalar_lea.vmem %s12, 16
    %1545 = vst [vmem:[%s1544] sm:$0xff] %v1540
    %1546 = vst [vmem:[%s1544 + $0x8] sm:$0xff] %v1542
    // Predicated region
    $region54: #{inference_predictor_forward.1} parent=1 // pred_check
      _
    $region55: #{inference_predictor_forward.1} parent=1 // pred_check_branch
      %1548 = sbr.rel (0) target = $region57
    $region56: #{inference_predictor_forward.1} parent=1 // pred_region
      _
    $region57: #{inference_predictor_forward.1} parent=1 // pred_fallthru
      _
    // Predicated region
    $region58: #{inference_predictor_forward.1} parent=1 // pred_check
      _
    $region59: #{inference_predictor_forward.1} parent=1 // pred_check_branch
      %1550 = sbr.rel (0) target = $region61
    $region60: #{inference_predictor_forward.1} parent=1 // pred_region
      _
    $region61: #{inference_predictor_forward.1} parent=1 // pred_fallthru
      _
    // Predicated region
    $region62: #{inference_predictor_forward.1} parent=1 // pred_check
      _
    $region63: #{inference_predictor_forward.1} parent=1 // pred_check_branch
      %1552 = sbr.rel (0) target = $region65
    $region64: #{inference_predictor_forward.1} parent=1 // pred_region
      _
    $region65: #{inference_predictor_forward.1} parent=1 // pred_fallthru
      _
    // Predicated region
    $region66: #{inference_predictor_forward.1} parent=1 // pred_check
      _
    $region67: #{inference_predictor_forward.1} parent=1 // pred_check_branch
      %1554 = sbr.rel (0) target = $region69
    $region68: #{inference_predictor_forward.1} parent=1 // pred_region
      _
    $region69: #{inference_predictor_forward.1} parent=1 // pred_fallthru
      _
    // Predicated region
    $region70: #{inference_predictor_forward.1} parent=1 // pred_check
      _
    $region71: #{inference_predictor_forward.1} parent=1 // pred_check_branch
      %1556 = sbr.rel (0) target = $region73
    $region72: #{inference_predictor_forward.1} parent=1 // pred_region
      _
    $region73: #{inference_predictor_forward.1} parent=1 // pred_fallthru
      _
    // Predicated region
    $region74: #{inference_predictor_forward.1} parent=1 // pred_check
      _
    $region75: #{inference_predictor_forward.1} parent=1 // pred_check_branch
      %1558 = sbr.rel (0) target = $region77
    $region76: #{inference_predictor_forward.1} parent=1 // pred_region
      _
    $region77: #{inference_predictor_forward.1} parent=1 // pred_fallthru
      _
    %1559 = vsyncpa [#allocation3], 1
    %1560 = vsyncpa [#allocation5], 1

</llo_original>
